<compile_context>
chip_gen: v6e
topology: v6e:2x2x1
jax: 0.10.0
libtpu: 0.0.40
codegen_flags: <defaults>
</compile_context>

<pallas_src>
import jax
import jax.numpy as jnp
from jax.experimental import pallas as pl
from jax.experimental.pallas import tpu as pltpu


_LANE = 128
_VMEM_LIMIT = 48 * 1024 * 1024   # < v7x 64 MiB physical; raises v5e/v6e default


def _round_up(x, m):
    return (x + m - 1) // m * m


def _pick_tile(n, max_tile):
    """n is a multiple of 128; largest multiple of 128 <= max_tile dividing n."""
    t = min(max_tile, n)
    t -= t % _LANE
    while t > _LANE and n % t != 0:
        t -= _LANE
    return max(t, _LANE)


# ----------------------------------------------------------------------------
# Kernel 1: 3-NN inverse-distance interpolation fused with layer-0 conv stats
# ----------------------------------------------------------------------------
def _make_interp_kernel(two_w, n_valid):
    """inputs : xyz1 (1,C,TN) f32, xyz2 (1,S,C) f32, points2 (1,D2,S) bf16,
                [p1 (1,D1,TN) bf16, w0a (C0,D1) bf16,] w0b (C0,D2) bf16
       outputs: interp (1,D2,TN) bf16, stats (1,C0,2) f32 (accumulated over t)
    """
    def kernel(*refs):
        if two_w:
            (x1_ref, x2_ref, p2_ref, p1_ref, wa_ref, wb_ref,
             out_ref, st_ref) = refs
        else:
            x1_ref, x2_ref, p2_ref, wb_ref, out_ref, st_ref = refs
            p1_ref = wa_ref = None

        t = pl.program_id(1)
        x1 = x1_ref[0].astype(jnp.float32)              # [C, TN]
        x2 = x2_ref[0].astype(jnp.float32)              # [S, C]
        p2 = p2_ref[0]                                  # [D2, S] bf16
        C, tn = x1.shape

        # Squared distances on the VPU (C == 3, unrolled); d >= 0 by construction.
        diff = x2[:, 0:1] - x1[0:1, :]
        d = diff * diff                                 # [S, TN]
        for c in range(1, C):
            diff = x2[:, c:c + 1] - x1[c:c + 1, :]
            d = d + diff * diff

        # 3 smallest distances per query column; masks re-derived from d.
        # TODO(synk): exactly-tied distances can select >3 neighbours here
        # (PyTorch's sort picks exactly 3 by index); measure-zero for real data.
        m1 = jnp.min(d, axis=0, keepdims=True)                            # [1,TN]
        m2 = jnp.min(jnp.where(d > m1, d, jnp.inf), axis=0, keepdims=True)
        m3 = jnp.min(jnp.where(d > m2, d, jnp.inf), axis=0, keepdims=True)
        r1 = pl.reciprocal(m1 + 1e-8, approx=True)       # EUP slot, near-free
        r2 = pl.reciprocal(m2 + 1e-8, approx=True)
        r3 = pl.reciprocal(m3 + 1e-8, approx=True)
        recip = (jnp.where(d <= m1, r1, 0.0)
                 + jnp.where((d > m1) & (d <= m2), r2, 0.0)
                 + jnp.where((d > m2) & (d <= m3), r3, 0.0))              # [S,TN]
        inv_norm = pl.reciprocal(jnp.sum(recip, axis=0, keepdims=True),
                                 approx=True)                             # [1,TN]

        acc = jnp.dot(p2, recip.astype(p2.dtype),
                      preferred_element_type=jnp.float32)                 # [D2,TN]
        interp = (acc * inv_norm).astype(out_ref.dtype)                   # bf16
        out_ref[0] = interp

        # Fused statistics of z0 = W0 @ [points1; interp] for layer-0 BN.
        z = jnp.dot(wb_ref[...], interp, preferred_element_type=jnp.float32)
        if two_w:
            z = z + jnp.dot(wa_ref[...], p1_ref[0],
                            preferred_element_type=jnp.float32)           # [C0,TN]
        if n_valid is not None:                          # mask padded columns
            col = t * tn + jax.lax.broadcasted_iota(jnp.int32, (1, tn), 1)
            z = z * (col < n_valid).astype(jnp.float32)
        part = jnp.concatenate(
            [jnp.sum(z, axis=-1, keepdims=True),
             jnp.sum(z * z, axis=-1, keepdims=True)], axis=-1)            # [C0,2]

        @pl.when(t == 0)
        def _():
            st_ref[...] = jnp.zeros_like(st_ref)
        st_ref[0] += part

    return kernel


def _interp_with_stats0(xyz1_p, xyz2_bsc, pts2_bf, p1_bf, w0a, w0b, n_valid, tn):
    B, C, Np = xyz1_p.shape
    S = xyz2_bsc.shape[1]
    D2 = pts2_bf.shape[1]
    C0 = w0b.shape[0]
    two_w = p1_bf is not None
    nt = Np // tn

    in_specs = [
        pl.BlockSpec((1, C, tn), lambda b, t: (b, 0, t)),
        pl.BlockSpec((1, S, C), lambda b, t: (b, 0, 0)),     # resident
        pl.BlockSpec((1, D2, S), lambda b, t: (b, 0, 0)),    # resident
    ]
    args = [xyz1_p, xyz2_bsc, pts2_bf]
    if two_w:
        D1 = p1_bf.shape[1]
        in_specs.append(pl.BlockSpec((1, D1, tn), lambda b, t: (b, 0, t)))
        args.append(p1_bf)
        in_specs.append(pl.BlockSpec(w0a.shape, lambda b, t: (0, 0)))
        args.append(w0a)
    in_specs.append(pl.BlockSpec(w0b.shape, lambda b, t: (0, 0)))
    args.append(w0b)

    interp, stats = pl.pallas_call(
        _make_interp_kernel(two_w, n_valid),
        out_shape=(jax.ShapeDtypeStruct((B, D2, Np), jnp.bfloat16),
                   jax.ShapeDtypeStruct((B, C0, 2), jnp.float32)),
        grid=(B, nt),
        in_specs=in_specs,
        out_specs=(pl.BlockSpec((1, D2, tn), lambda b, t: (b, 0, t)),
                   pl.BlockSpec((1, C0, 2), lambda b, t: (b, 0, 0))),
        compiler_params=pltpu.CompilerParams(
            dimension_semantics=("parallel", "arbitrary"),
            vmem_limit_bytes=_VMEM_LIMIT),
    )(*args)
    return interp, stats


# ----------------------------------------------------------------------------
# Kernel 2: Conv1d(k=1) + folded-BN scale/shift + ReLU, fused with the NEXT
#           layer's batch-norm statistics (sum, sum-of-squares of W_next @ y)
# ----------------------------------------------------------------------------
def _make_conv_kernel(num_x, emit_stats, n_valid):
    def kernel(*refs):
        x_refs = refs[:num_x]
        w_refs = refs[num_x:2 * num_x]
        pos = 2 * num_x
        sc_ref = refs[pos]
        pos += 1
        wn_ref = None
        if emit_stats:
            wn_ref = refs[pos]
            pos += 1
        y_ref = refs[pos]
        pos += 1
        st_ref = refs[pos] if emit_stats else None

        z = jnp.dot(w_refs[0][...], x_refs[0][0],
                    preferred_element_type=jnp.float32)                   # [Cout,TM]
        for j in range(1, num_x):                       # concat-free split-W sum
            z = z + jnp.dot(w_refs[j][...], x_refs[j][0],
                            preferred_element_type=jnp.float32)
        scale = sc_ref[:, 0:1]                                            # [Cout,1]
        shift = sc_ref[:, 1:2]
        y = jnp.maximum(z * scale + shift, 0.0).astype(y_ref.dtype)
        y_ref[0] = y

        if emit_stats:
            t = pl.program_id(1)
            zn = jnp.dot(wn_ref[...], y.astype(wn_ref.dtype),
                         preferred_element_type=jnp.float32)              # [Cn,TM]
            tm = zn.shape[-1]
            if n_valid is not None:                      # mask padded columns
                col = t * tm + jax.lax.broadcasted_iota(jnp.int32, (1, tm), 1)
                zn = zn * (col < n_valid).astype(jnp.float32)
            part = jnp.concatenate(
                [jnp.sum(zn, axis=-1, keepdims=True),
                 jnp.sum(zn * zn, axis=-1, keepdims=True)], axis=-1)      # [Cn,2]

            @pl.when(t == 0)
            def _():
                st_ref[...] = jnp.zeros_like(st_ref)
            st_ref[0] += part

    return kernel


def _conv_bn_relu_layer(xs, ws, sc, w_next, out_dtype, n_valid, tm):
    B = xs[0].shape[0]
    Np = xs[0].shape[2]
    Cout = ws[0].shape[0]
    nt = Np // tm
    emit = w_next is not None

    in_specs = []
    args = []
    for x in xs:
        cin = x.shape[1]
        in_specs.append(pl.BlockSpec((1, cin, tm), lambda b, t: (b, 0, t)))
        args.append(x)
    for w in ws:
        in_specs.append(pl.BlockSpec(w.shape, lambda b, t: (0, 0)))
        args.append(w)
    in_specs.append(pl.BlockSpec((Cout, 2), lambda b, t: (0, 0)))
    args.append(sc)

    out_shape = [jax.ShapeDtypeStruct((B, Cout, Np), out_dtype)]
    out_specs = [pl.BlockSpec((1, Cout, tm), lambda b, t: (b, 0, t))]
    if emit:
        Cn = w_next.shape[0]
        in_specs.append(pl.BlockSpec(w_next.shape, lambda b, t: (0, 0)))
        args.append(w_next)
        out_shape.append(jax.ShapeDtypeStruct((B, Cn, 2), jnp.float32))
        out_specs.append(pl.BlockSpec((1, Cn, 2), lambda b, t: (b, 0, 0)))
        sem = ("parallel", "arbitrary")      # stats accumulate across t
    else:
        sem = ("parallel", "parallel")

    outs = pl.pallas_call(
        _make_conv_kernel(len(xs), emit, n_valid),
        out_shape=out_shape,
        grid=(B, nt),
        in_specs=in_specs,
        out_specs=out_specs,
        compiler_params=pltpu.CompilerParams(
            dimension_semantics=sem, vmem_limit_bytes=_VMEM_LIMIT),
    )(*args)
    if emit:
        return outs[0], outs[1]
    return outs[0], None


def _fold_bn(stats_partial, count, gamma, beta):
    """Fold training-mode BatchNorm1d into per-channel (scale, shift).
    The Conv1d bias cancels exactly under training-mode BN."""
    stats = jnp.sum(stats_partial, axis=0)                      # [Cout, 2]
    mean = stats[:, 0] / count
    var = jnp.maximum(stats[:, 1] / count - mean * mean, 0.0)   # biased var
    inv_std = jax.lax.rsqrt(var + 1e-5)
    scale = gamma * inv_std
    shift = beta - mean * scale
    return jnp.stack([scale, shift], axis=-1).astype(jnp.float32)


# ----------------------------------------------------------------------------
# Full forward (glue in plain JAX, hot paths in the kernels above)
# ----------------------------------------------------------------------------
@jax.jit
def feature_propagation_forward(xyz1, xyz2, points1, points2, params):
    """xyz1:[B,C,N] xyz2:[B,C,S] points1:[B,D1,N]|None points2:[B,D2,S]
    params: list of (conv_w [Cout,Cin], conv_b, bn_gamma, bn_beta) -> [B,D',N]"""
    B, C, N = xyz1.shape
    S = xyz2.shape[2]
    D2 = points2.shape[1]
    L = len(params)

    # Pad N to a lane-aligned size; BN statistics mask the padded columns.
    Np = _round_up(N, _LANE)
    pad = Np - N
    n_valid = N if pad else None

    xyz1_p = xyz1.astype(jnp.float32)
    p1 = points1.astype(jnp.bfloat16) if points1 is not None else None
    if pad:
        xyz1_p = jnp.pad(xyz1_p, ((0, 0), (0, 0), (0, pad)))
        if p1 is not None:
            p1 = jnp.pad(p1, ((0, 0), (0, 0), (0, pad)))

    w_bf = [w.astype(jnp.bfloat16) for (w, _, _, _) in params]
    if p1 is not None:
        D1 = p1.shape[1]
        w0a, w0b = w_bf[0][:, :D1], w_bf[0][:, D1:]
    else:
        w0a, w0b = None, w_bf[0]

    tn = _pick_tile(Np, 512)     # interp tile (a few [S, tn] f32 temporaries)
    tm = _pick_tile(Np, 1024)    # conv tile (bf16 activations)
    count = float(B * N)
    pts2_bf = points2.astype(jnp.bfloat16)

    if S > 1:
        xyz2_bsc = jnp.transpose(xyz2, (0, 2, 1)).astype(jnp.float32)  # [B,S,C]
        interp, stats = _interp_with_stats0(
            xyz1_p, xyz2_bsc, pts2_bf, p1, w0a, w0b, n_valid, tn)
    else:
        # PyTorch branch: points2.repeat(1, N, 1) == broadcast single sample.
        # TODO(synk): rare edge path -- layer-0 stats via XLA einsums here.
        interp = jnp.broadcast_to(pts2_bf, (B, D2, Np))
        z0 = jnp.einsum('od,bdn->bon', w0b, interp,
                        preferred_element_type=jnp.float32)
        if p1 is not None:
            z0 = z0 + jnp.einsum('od,bdn->bon', w0a, p1,
                                 preferred_element_type=jnp.float32)
        z0 = z0[:, :, :N]
        stats = jnp.stack([jnp.sum(z0, axis=(0, 2)),
                           jnp.sum(z0 * z0, axis=(0, 2))], axis=-1)[None]

    x = None
    for i, (_w, _b, gamma, beta) in enumerate(params):
        sc = _fold_bn(stats, count, gamma, beta)          # [Cout, 2] f32
        last = (i == L - 1)
        w_next = None if last else w_bf[i + 1]
        out_dtype = jnp.float32 if last else jnp.bfloat16
        if i == 0 and p1 is not None:
            xs, ws = [p1, interp], [w0a, w0b]             # concat-free 1st layer
        elif i == 0:
            xs, ws = [interp], [w_bf[0]]
        else:
            xs, ws = [x], [w_bf[i]]
        x, stats = _conv_bn_relu_layer(xs, ws, sc, w_next, out_dtype,
                                       n_valid, tm)
    return x[:, :, :N] if pad else x


# ----------------------------------------------------------------------------
# Pure-JAX reference (f32 throughout) for the correctness check
# ----------------------------------------------------------------------------
def reference_forward(xyz1, xyz2, points1, points2, params):
    x1 = jnp.transpose(xyz1, (0, 2, 1))
    x2 = jnp.transpose(xyz2, (0, 2, 1))
    p2 = jnp.transpose(points2, (0, 2, 1))
    B, N, _ = x1.shape
    d = (jnp.sum(x1 ** 2, -1)[:, :, None] + jnp.sum(x2 ** 2, -1)[:, None, :]
         - 2.0 * jnp.einsum('bnc,bsc->bns', x1, x2))
    idx = jnp.argsort(d, axis=-1)[:, :, :3]                          # [B, N, 3]
    dd = jnp.take_along_axis(d, idx, axis=-1)
    recip = 1.0 / (dd + 1e-8)
    w = recip / jnp.sum(recip, -1, keepdims=True)                    # [B, N, 3]
    gathered = p2[jnp.arange(B)[:, None, None], idx]                 # [B,N,3,D2]
    interp = jnp.sum(gathered * w[..., None], axis=2)                # [B, N, D2]
    p1 = jnp.transpose(points1, (0, 2, 1))
    new_points = jnp.concatenate([p1, interp], axis=-1)              # [B,N,Cin]
    x = jnp.transpose(new_points, (0, 2, 1))                         # [B,Cin,N]
    for (wgt, b, g, bt) in params:
        y = jnp.einsum('oc,bcn->bon', wgt, x) + b[None, :, None]
        mean = jnp.mean(y, axis=(0, 2), keepdims=True)
        var = jnp.mean((y - mean) ** 2, axis=(0, 2), keepdims=True)
        y = (y - mean) / jnp.sqrt(var + 1e-5)
        y = y * g[None, :, None] + bt[None, :, None]
        x = jnp.maximum(y, 0.0)
    return x


if __name__ == "__main__":
    # small shapes: batch=2, xyz-coords=3, N=16 dense points, S=8 sampled
    # points, D1=6 skip features, D2=8 coarse features, mlp = [32, 16]
    B, C, N, S, D1, D2 = 2, 3, 16, 8, 6, 8
    mlp = (32, 16)

    key = jax.random.PRNGKey(0)
    k = jax.random.split(key, 8)
    xyz1 = jax.random.normal(k[0], (B, C, N), jnp.float32)
    xyz2 = jax.random.normal(k[1], (B, C, S), jnp.float32)
    points1 = jax.random.normal(k[2], (B, D1, N), jnp.float32)
    points2 = jax.random.normal(k[3], (B, D2, S), jnp.float32)

    # deterministic parameter init (Conv1d weight [Cout,Cin], bias, BN g/b)
    params = []
    last = D1 + D2
    pk = k[4]
    for cout in mlp:
        pk, kw, kb, kg, kbt = jax.random.split(pk, 5)
        w = 0.1 * jax.random.normal(kw, (cout, last), jnp.float32)
        b = 0.1 * jax.random.normal(kb, (cout,), jnp.float32)
        g = 1.0 + 0.05 * jax.random.normal(kg, (cout,), jnp.float32)
        bt = 0.05 * jax.random.normal(kbt, (cout,), jnp.float32)
        params.append((w, b, g, bt))
        last = cout

    out = feature_propagation_forward(xyz1, xyz2, points1, points2, params)
    out = jax.block_until_ready(out)
    assert out.shape == (B, mlp[-1], N), out.shape

    ref = reference_forward(xyz1, xyz2, points1, points2, params)
    err = float(jnp.max(jnp.abs(out - ref)))
    # bf16 activation slabs + approx reciprocals -> loosened tolerance vs f32 ref
    assert jnp.allclose(out, ref, rtol=5e-2, atol=5e-2), err

    print("KERNEL_OK")
</pallas_src>

<mosaic_0001>
module attributes {stable_mosaic.version = 11 : i64} {
  func.func @kernel(%arg0: i32, %arg1: i32, %arg2: memref<1x3x128xf32, #tpu.memory_space<vmem>>, %arg3: memref<1x8x3xf32, #tpu.memory_space<vmem>>, %arg4: memref<1x8x8xbf16, #tpu.memory_space<vmem>>, %arg5: memref<1x6x128xbf16, #tpu.memory_space<vmem>>, %arg6: memref<32x6xbf16, #tpu.memory_space<vmem>>, %arg7: memref<32x8xbf16, #tpu.memory_space<vmem>>, %arg8: memref<1x8x128xbf16, #tpu.memory_space<vmem>>, %arg9: memref<1x32x2xf32, #tpu.memory_space<vmem>>) attributes {dimension_semantics = [#tpu.dimension_semantics<parallel>, #tpu.dimension_semantics<arbitrary>], iteration_bounds = array<i64: 2, 1>, scalar_prefetch = 0 : i64, scratch_operands = 0 : i64, tpu.core_type = #tpu.core_type<tc>, window_params = [{transform_indices = @transform_0, window_bounds = array<i64: 1, 3, 128>}, {transform_indices = @transform_1, window_bounds = array<i64: 1, 8, 3>}, {transform_indices = @transform_2, window_bounds = array<i64: 1, 8, 8>}, {transform_indices = @transform_3, window_bounds = array<i64: 1, 6, 128>}, {pipeline_mode = #tpu.pipeline_mode<synchronous>, transform_indices = @transform_4, window_bounds = array<i64: 32, 6>}, {pipeline_mode = #tpu.pipeline_mode<synchronous>, transform_indices = @transform_5, window_bounds = array<i64: 32, 8>}, {transform_indices = @transform_6, window_bounds = array<i64: 1, 8, 128>}, {transform_indices = @transform_7, window_bounds = array<i64: 1, 32, 2>}]} {
    %c0 = arith.constant 0 : index
    %c0_0 = arith.constant 0 : index
    %c0_1 = arith.constant 0 : index
    %0 = vector.load %arg2[%c0, %c0_0, %c0_1] : memref<1x3x128xf32, #tpu.memory_space<vmem>>, vector<1x3x128xf32>
    %1 = vector.shape_cast %0 : vector<1x3x128xf32> to vector<3x128xf32>
    %c0_2 = arith.constant 0 : index
    %c0_3 = arith.constant 0 : index
    %c0_4 = arith.constant 0 : index
    %2 = vector.load %arg3[%c0_2, %c0_3, %c0_4] : memref<1x8x3xf32, #tpu.memory_space<vmem>>, vector<1x8x3xf32>
    %3 = vector.shape_cast %2 : vector<1x8x3xf32> to vector<8x3xf32>
    %c0_5 = arith.constant 0 : index
    %c0_6 = arith.constant 0 : index
    %c0_7 = arith.constant 0 : index
    %4 = vector.load %arg4[%c0_5, %c0_6, %c0_7] : memref<1x8x8xbf16, #tpu.memory_space<vmem>>, vector<1x8x8xbf16>
    %5 = vector.shape_cast %4 : vector<1x8x8xbf16> to vector<8x8xbf16>
    %6 = vector.extract_strided_slice %3 {offsets = [0, 0], sizes = [8, 1], strides = [1, 1]} : vector<8x3xf32> to vector<8x1xf32>
    %7 = vector.extract_strided_slice %1 {offsets = [0, 0], sizes = [1, 128], strides = [1, 1]} : vector<3x128xf32> to vector<1x128xf32>
    %8 = vector.broadcast %6 : vector<8x1xf32> to vector<8x128xf32>
    %9 = vector.broadcast %7 : vector<1x128xf32> to vector<8x128xf32>
    %10 = arith.subf %8, %9 : vector<8x128xf32>
    %11 = arith.mulf %10, %10 : vector<8x128xf32>
    %12 = vector.extract_strided_slice %3 {offsets = [0, 1], sizes = [8, 1], strides = [1, 1]} : vector<8x3xf32> to vector<8x1xf32>
    %13 = vector.extract_strided_slice %1 {offsets = [1, 0], sizes = [1, 128], strides = [1, 1]} : vector<3x128xf32> to vector<1x128xf32>
    %14 = vector.broadcast %12 : vector<8x1xf32> to vector<8x128xf32>
    %15 = vector.broadcast %13 : vector<1x128xf32> to vector<8x128xf32>
    %16 = arith.subf %14, %15 : vector<8x128xf32>
    %17 = arith.mulf %16, %16 : vector<8x128xf32>
    %18 = arith.addf %11, %17 : vector<8x128xf32>
    %19 = vector.extract_strided_slice %3 {offsets = [0, 2], sizes = [8, 1], strides = [1, 1]} : vector<8x3xf32> to vector<8x1xf32>
    %20 = vector.extract_strided_slice %1 {offsets = [2, 0], sizes = [1, 128], strides = [1, 1]} : vector<3x128xf32> to vector<1x128xf32>
    %21 = vector.broadcast %19 : vector<8x1xf32> to vector<8x128xf32>
    %22 = vector.broadcast %20 : vector<1x128xf32> to vector<8x128xf32>
    %23 = arith.subf %21, %22 : vector<8x128xf32>
    %24 = arith.mulf %23, %23 : vector<8x128xf32>
    %25 = arith.addf %18, %24 : vector<8x128xf32>
    %cst = arith.constant dense<0x7F800000> : vector<128xf32>
    %26 = vector.multi_reduction <minimumf>, %25, %cst [0] : vector<8x128xf32> to vector<128xf32>
    %27 = vector.shape_cast %26 : vector<128xf32> to vector<1x128xf32>
    %28 = vector.broadcast %27 : vector<1x128xf32> to vector<8x128xf32>
    %29 = arith.cmpf ogt, %25, %28 : vector<8x128xf32>
    %cst_8 = arith.constant 0x7F800000 : f32
    %30 = vector.broadcast %cst_8 : f32 to vector<8x128xf32>
    %31 = arith.select %29, %25, %30 : vector<8x128xi1>, vector<8x128xf32>
    %cst_9 = arith.constant dense<0x7F800000> : vector<128xf32>
    %32 = vector.multi_reduction <minimumf>, %31, %cst_9 [0] : vector<8x128xf32> to vector<128xf32>
    %33 = vector.shape_cast %32 : vector<128xf32> to vector<1x128xf32>
    %34 = vector.broadcast %33 : vector<1x128xf32> to vector<8x128xf32>
    %35 = arith.cmpf ogt, %25, %34 : vector<8x128xf32>
    %cst_10 = arith.constant 0x7F800000 : f32
    %36 = vector.broadcast %cst_10 : f32 to vector<8x128xf32>
    %37 = arith.select %35, %25, %36 : vector<8x128xi1>, vector<8x128xf32>
    %cst_11 = arith.constant dense<0x7F800000> : vector<128xf32>
    %38 = vector.multi_reduction <minimumf>, %37, %cst_11 [0] : vector<8x128xf32> to vector<128xf32>
    %39 = vector.shape_cast %38 : vector<128xf32> to vector<1x128xf32>
    %cst_12 = arith.constant 9.99999993E-9 : f32
    %40 = vector.broadcast %cst_12 : f32 to vector<1x128xf32>
    %41 = arith.addf %27, %40 : vector<1x128xf32>
    %42 = tpu.reciprocal %41 {approx = true} : vector<1x128xf32> -> vector<1x128xf32>
    %cst_13 = arith.constant 9.99999993E-9 : f32
    %43 = vector.broadcast %cst_13 : f32 to vector<1x128xf32>
    %44 = arith.addf %33, %43 : vector<1x128xf32>
    %45 = tpu.reciprocal %44 {approx = true} : vector<1x128xf32> -> vector<1x128xf32>
    %cst_14 = arith.constant 9.99999993E-9 : f32
    %46 = vector.broadcast %cst_14 : f32 to vector<1x128xf32>
    %47 = arith.addf %39, %46 : vector<1x128xf32>
    %48 = tpu.reciprocal %47 {approx = true} : vector<1x128xf32> -> vector<1x128xf32>
    %49 = vector.broadcast %27 : vector<1x128xf32> to vector<8x128xf32>
    %50 = arith.cmpf ole, %25, %49 : vector<8x128xf32>
    %cst_15 = arith.constant 0.000000e+00 : f32
    %51 = vector.shape_cast %42 : vector<1x128xf32> to vector<1x128xf32>
    %52 = vector.broadcast %51 : vector<1x128xf32> to vector<8x128xf32>
    %53 = vector.broadcast %cst_15 : f32 to vector<8x128xf32>
    %54 = arith.select %50, %52, %53 : vector<8x128xi1>, vector<8x128xf32>
    %55 = vector.broadcast %27 : vector<1x128xf32> to vector<8x128xf32>
    %56 = arith.cmpf ogt, %25, %55 : vector<8x128xf32>
    %57 = vector.broadcast %33 : vector<1x128xf32> to vector<8x128xf32>
    %58 = arith.cmpf ole, %25, %57 : vector<8x128xf32>
    %59 = arith.andi %56, %58 : vector<8x128xi1>
    %cst_16 = arith.constant 0.000000e+00 : f32
    %60 = vector.shape_cast %45 : vector<1x128xf32> to vector<1x128xf32>
    %61 = vector.broadcast %60 : vector<1x128xf32> to vector<8x128xf32>
    %62 = vector.broadcast %cst_16 : f32 to vector<8x128xf32>
    %63 = arith.select %59, %61, %62 : vector<8x128xi1>, vector<8x128xf32>
    %64 = arith.addf %54, %63 : vector<8x128xf32>
    %65 = vector.broadcast %33 : vector<1x128xf32> to vector<8x128xf32>
    %66 = arith.cmpf ogt, %25, %65 : vector<8x128xf32>
    %67 = vector.broadcast %39 : vector<1x128xf32> to vector<8x128xf32>
    %68 = arith.cmpf ole, %25, %67 : vector<8x128xf32>
    %69 = arith.andi %66, %68 : vector<8x128xi1>
    %cst_17 = arith.constant 0.000000e+00 : f32
    %70 = vector.shape_cast %48 : vector<1x128xf32> to vector<1x128xf32>
    %71 = vector.broadcast %70 : vector<1x128xf32> to vector<8x128xf32>
    %72 = vector.broadcast %cst_17 : f32 to vector<8x128xf32>
    %73 = arith.select %69, %71, %72 : vector<8x128xi1>, vector<8x128xf32>
    %74 = arith.addf %64, %73 : vector<8x128xf32>
    %cst_18 = arith.constant dense<0.000000e+00> : vector<128xf32>
    %75 = vector.multi_reduction <add>, %74, %cst_18 [0] : vector<8x128xf32> to vector<128xf32>
    %76 = vector.shape_cast %75 : vector<128xf32> to vector<1x128xf32>
    %77 = tpu.reciprocal %76 {approx = true} : vector<1x128xf32> -> vector<1x128xf32>
    %78 = arith.truncf %74 : vector<8x128xf32> to vector<8x128xbf16>
    %cst_19 = arith.constant dense<0.000000e+00> : vector<8x128xf32>
    %79 = tpu.matmul %5, %78, %cst_19 {dimension_numbers = #tpu.dot_dimension_numbers<[1], [0], [0], [1], [0, 0, 1, 1], [], []>} : vector<8x8xbf16>, vector<8x128xbf16>, vector<8x128xf32> -> vector<8x128xf32>
    %80 = vector.broadcast %77 : vector<1x128xf32> to vector<8x128xf32>
    %81 = arith.mulf %79, %80 : vector<8x128xf32>
    %82 = arith.truncf %81 : vector<8x128xf32> to vector<8x128xbf16>
    %c0_20 = arith.constant 0 : index
    %c0_21 = arith.constant 0 : index
    %c0_22 = arith.constant 0 : index
    %83 = vector.load %arg8[%c0_20, %c0_21, %c0_22] : memref<1x8x128xbf16, #tpu.memory_space<vmem>>, vector<1x8x128xbf16>
    %84 = vector.shape_cast %83 : vector<1x8x128xbf16> to vector<8x128xbf16>
    %85 = vector.shape_cast %82 : vector<8x128xbf16> to vector<1x8x128xbf16>
    tpu.vector_store %arg8[%c0_20, %c0_21, %c0_22], %85 {strides = array<i32>} : memref<1x8x128xbf16, #tpu.memory_space<vmem>>, vector<1x8x128xbf16>,
    %c0_23 = arith.constant 0 : index
    %c0_24 = arith.constant 0 : index
    %86 = vector.load %arg7[%c0_23, %c0_24] : memref<32x8xbf16, #tpu.memory_space<vmem>>, vector<32x8xbf16>
    %cst_25 = arith.constant dense<0.000000e+00> : vector<32x128xf32>
    %87 = tpu.matmul %86, %82, %cst_25 {dimension_numbers = #tpu.dot_dimension_numbers<[1], [0], [0], [1], [0, 0, 1, 1], [], []>} : vector<32x8xbf16>, vector<8x128xbf16>, vector<32x128xf32> -> vector<32x128xf32>
    %c0_26 = arith.constant 0 : index
    %c0_27 = arith.constant 0 : index
    %88 = vector.load %arg6[%c0_26, %c0_27] : memref<32x6xbf16, #tpu.memory_space<vmem>>, vector<32x6xbf16>
    %c0_28 = arith.constant 0 : index
    %c0_29 = arith.constant 0 : index
    %c0_30 = arith.constant 0 : index
    %89 = vector.load %arg5[%c0_28, %c0_29, %c0_30] : memref<1x6x128xbf16, #tpu.memory_space<vmem>>, vector<1x6x128xbf16>
    %90 = vector.shape_cast %89 : vector<1x6x128xbf16> to vector<6x128xbf16>
    %cst_31 = arith.constant dense<0.000000e+00> : vector<32x128xf32>
    %91 = tpu.matmul %88, %90, %cst_31 {dimension_numbers = #tpu.dot_dimension_numbers<[1], [0], [0], [1], [0, 0, 1, 1], [], []>} : vector<32x6xbf16>, vector<6x128xbf16>, vector<32x128xf32> -> vector<32x128xf32>
    %92 = arith.addf %87, %91 : vector<32x128xf32>
    %c128_i32 = arith.constant 128 : i32
    %93 = arith.muli %arg1, %c128_i32 : i32
    %94 = tpu.iota {dimensions = array<i32: 1>} : vector<1x128xi32>
    %95 = vector.broadcast %93 : i32 to vector<1x128xi32>
    %96 = arith.addi %95, %94 : vector<1x128xi32>
    %c16_i32 = arith.constant 16 : i32
    %97 = vector.broadcast %c16_i32 : i32 to vector<1x128xi32>
    %98 = arith.cmpi slt, %96, %97 : vector<1x128xi32>
    %99 = arith.extui %98 : vector<1x128xi1> to vector<1x128xi32>
    %100 = arith.sitofp %99 : vector<1x128xi32> to vector<1x128xf32>
    %101 = vector.broadcast %100 : vector<1x128xf32> to vector<32x128xf32>
    %102 = arith.mulf %92, %101 : vector<32x128xf32>
    %cst_32 = arith.constant dense<0.000000e+00> : vector<32xf32>
    %103 = vector.multi_reduction <add>, %102, %cst_32 [1] : vector<32x128xf32> to vector<32xf32>
    %104 = vector.shape_cast %103 : vector<32xf32> to vector<32x1xf32>
    %105 = arith.mulf %102, %102 : vector<32x128xf32>
    %cst_33 = arith.constant dense<0.000000e+00> : vector<32xf32>
    %106 = vector.multi_reduction <add>, %105, %cst_33 [1] : vector<32x128xf32> to vector<32xf32>
    %107 = vector.shape_cast %106 : vector<32xf32> to vector<32x1xf32>
    %108 = tpu.concatenate %104, %107 in 1 : vector<32x1xf32>, vector<32x1xf32> -> vector<32x2xf32>
    %c0_i32 = arith.constant 0 : i32
    %109 = arith.cmpi eq, %arg1, %c0_i32 : i32
    %110 = arith.extui %109 : i1 to i32
    %c0_i32_34 = arith.constant 0 : i32
    %111 = arith.cmpi ne, %110, %c0_i32_34 : i32
    scf.if %111 {
      %cst_41 = arith.constant 0.000000e+00 : f32
      %118 = vector.broadcast %cst_41 : f32 to vector<1x32x2xf32>
      %c0_42 = arith.constant 0 : index
      %c0_43 = arith.constant 0 : index
      %c0_44 = arith.constant 0 : index
      %119 = vector.load %arg9[%c0_42, %c0_43, %c0_44] : memref<1x32x2xf32, #tpu.memory_space<vmem>>, vector<1x32x2xf32>
      tpu.vector_store %arg9[%c0_42, %c0_43, %c0_44], %118 {strides = array<i32>} : memref<1x32x2xf32, #tpu.memory_space<vmem>>, vector<1x32x2xf32>,
    } else {
    }
    %c0_35 = arith.constant 0 : index
    %c0_36 = arith.constant 0 : index
    %c0_37 = arith.constant 0 : index
    %112 = vector.load %arg9[%c0_35, %c0_36, %c0_37] : memref<1x32x2xf32, #tpu.memory_space<vmem>>, vector<1x32x2xf32>
    %113 = vector.shape_cast %112 : vector<1x32x2xf32> to vector<32x2xf32>
    %114 = arith.addf %113, %108 : vector<32x2xf32>
    %c0_38 = arith.constant 0 : index
    %c0_39 = arith.constant 0 : index
    %c0_40 = arith.constant 0 : index
    %115 = vector.load %arg9[%c0_38, %c0_39, %c0_40] : memref<1x32x2xf32, #tpu.memory_space<vmem>>, vector<1x32x2xf32>
    %116 = vector.shape_cast %115 : vector<1x32x2xf32> to vector<32x2xf32>
    %117 = vector.shape_cast %114 : vector<32x2xf32> to vector<1x32x2xf32>
    tpu.vector_store %arg9[%c0_38, %c0_39, %c0_40], %117 {strides = array<i32>} : memref<1x32x2xf32, #tpu.memory_space<vmem>>, vector<1x32x2xf32>,
    return
  }
  func.func @transform_0(%arg0: i32, %arg1: i32) -> (i32, i32, i32) {
    %c0_i32 = arith.constant 0 : i32
    %c0_i32_0 = arith.constant 0 : i32
    return %arg0, %c0_i32, %arg1 : i32, i32, i32
  }
  func.func @transform_1(%arg0: i32, %arg1: i32) -> (i32, i32, i32) {
    %c0_i32 = arith.constant 0 : i32
    %c0_i32_0 = arith.constant 0 : i32
    %c0_i32_1 = arith.constant 0 : i32
    return %arg0, %c0_i32, %c0_i32_0 : i32, i32, i32
  }
  func.func @transform_2(%arg0: i32, %arg1: i32) -> (i32, i32, i32) {
    %c0_i32 = arith.constant 0 : i32
    %c0_i32_0 = arith.constant 0 : i32
    %c0_i32_1 = arith.constant 0 : i32
    return %arg0, %c0_i32, %c0_i32_0 : i32, i32, i32
  }
  func.func @transform_3(%arg0: i32, %arg1: i32) -> (i32, i32, i32) {
    %c0_i32 = arith.constant 0 : i32
    %c0_i32_0 = arith.constant 0 : i32
    return %arg0, %c0_i32, %arg1 : i32, i32, i32
  }
  func.func @transform_4(%arg0: i32, %arg1: i32) -> (i32, i32) {
    %c0_i32 = arith.constant 0 : i32
    %c0_i32_0 = arith.constant 0 : i32
    %c0_i32_1 = arith.constant 0 : i32
    return %c0_i32, %c0_i32_0 : i32, i32
  }
  func.func @transform_5(%arg0: i32, %arg1: i32) -> (i32, i32) {
    %c0_i32 = arith.constant 0 : i32
    %c0_i32_0 = arith.constant 0 : i32
    %c0_i32_1 = arith.constant 0 : i32
    return %c0_i32, %c0_i32_0 : i32, i32
  }
  func.func @transform_6(%arg0: i32, %arg1: i32) -> (i32, i32, i32) {
    %c0_i32 = arith.constant 0 : i32
    %c0_i32_0 = arith.constant 0 : i32
    return %arg0, %c0_i32, %arg1 : i32, i32, i32
  }
  func.func @transform_7(%arg0: i32, %arg1: i32) -> (i32, i32, i32) {
    %c0_i32 = arith.constant 0 : i32
    %c0_i32_0 = arith.constant 0 : i32
    %c0_i32_1 = arith.constant 0 : i32
    return %arg0, %c0_i32, %c0_i32_0 : i32, i32, i32
  }
}

module attributes {stable_mosaic.version = 11 : i64} {
  func.func @kernel(%arg0: i32, %arg1: i32, %arg2: memref<1x6x128xbf16, #tpu.memory_space<vmem>>, %arg3: memref<1x8x128xbf16, #tpu.memory_space<vmem>>, %arg4: memref<32x6xbf16, #tpu.memory_space<vmem>>, %arg5: memref<32x8xbf16, #tpu.memory_space<vmem>>, %arg6: memref<32x2xf32, #tpu.memory_space<vmem>>, %arg7: memref<16x32xbf16, #tpu.memory_space<vmem>>, %arg8: memref<1x32x128xbf16, #tpu.memory_space<vmem>>, %arg9: memref<1x16x2xf32, #tpu.memory_space<vmem>>) attributes {dimension_semantics = [#tpu.dimension_semantics<parallel>, #tpu.dimension_semantics<arbitrary>], iteration_bounds = array<i64: 2, 1>, scalar_prefetch = 0 : i64, scratch_operands = 0 : i64, tpu.core_type = #tpu.core_type<tc>, window_params = [{transform_indices = @transform_0, window_bounds = array<i64: 1, 6, 128>}, {transform_indices = @transform_1, window_bounds = array<i64: 1, 8, 128>}, {pipeline_mode = #tpu.pipeline_mode<synchronous>, transform_indices = @transform_2, window_bounds = array<i64: 32, 6>}, {pipeline_mode = #tpu.pipeline_mode<synchronous>, transform_indices = @transform_3, window_bounds = array<i64: 32, 8>}, {pipeline_mode = #tpu.pipeline_mode<synchronous>, transform_indices = @transform_4, window_bounds = array<i64: 32, 2>}, {pipeline_mode = #tpu.pipeline_mode<synchronous>, transform_indices = @transform_5, window_bounds = array<i64: 16, 32>}, {transform_indices = @transform_6, window_bounds = array<i64: 1, 32, 128>}, {transform_indices = @transform_7, window_bounds = array<i64: 1, 16, 2>}]} {
    %c0 = arith.constant 0 : index
    %c0_0 = arith.constant 0 : index
    %0 = vector.load %arg4[%c0, %c0_0] : memref<32x6xbf16, #tpu.memory_space<vmem>>, vector<32x6xbf16>
    %c0_1 = arith.constant 0 : index
    %c0_2 = arith.constant 0 : index
    %c0_3 = arith.constant 0 : index
    %1 = vector.load %arg2[%c0_1, %c0_2, %c0_3] : memref<1x6x128xbf16, #tpu.memory_space<vmem>>, vector<1x6x128xbf16>
    %2 = vector.shape_cast %1 : vector<1x6x128xbf16> to vector<6x128xbf16>
    %cst = arith.constant dense<0.000000e+00> : vector<32x128xf32>
    %3 = tpu.matmul %0, %2, %cst {dimension_numbers = #tpu.dot_dimension_numbers<[1], [0], [0], [1], [0, 0, 1, 1], [], []>} : vector<32x6xbf16>, vector<6x128xbf16>, vector<32x128xf32> -> vector<32x128xf32>
    %c0_4 = arith.constant 0 : index
    %c0_5 = arith.constant 0 : index
    %4 = vector.load %arg5[%c0_4, %c0_5] : memref<32x8xbf16, #tpu.memory_space<vmem>>, vector<32x8xbf16>
    %c0_6 = arith.constant 0 : index
    %c0_7 = arith.constant 0 : index
    %c0_8 = arith.constant 0 : index
    %5 = vector.load %arg3[%c0_6, %c0_7, %c0_8] : memref<1x8x128xbf16, #tpu.memory_space<vmem>>, vector<1x8x128xbf16>
    %6 = vector.shape_cast %5 : vector<1x8x128xbf16> to vector<8x128xbf16>
    %cst_9 = arith.constant dense<0.000000e+00> : vector<32x128xf32>
    %7 = tpu.matmul %4, %6, %cst_9 {dimension_numbers = #tpu.dot_dimension_numbers<[1], [0], [0], [1], [0, 0, 1, 1], [], []>} : vector<32x8xbf16>, vector<8x128xbf16>, vector<32x128xf32> -> vector<32x128xf32>
    %8 = arith.addf %3, %7 : vector<32x128xf32>
    %c0_10 = arith.constant 0 : index
    %c0_11 = arith.constant 0 : index
    %9 = vector.load %arg6[%c0_10, %c0_11] : memref<32x2xf32, #tpu.memory_space<vmem>>, vector<32x1xf32>
    %c0_12 = arith.constant 0 : index
    %c1 = arith.constant 1 : index
    %10 = vector.load %arg6[%c0_12, %c1] : memref<32x2xf32, #tpu.memory_space<vmem>>, vector<32x1xf32>
    %11 = vector.broadcast %9 : vector<32x1xf32> to vector<32x128xf32>
    %12 = arith.mulf %8, %11 : vector<32x128xf32>
    %13 = vector.broadcast %10 : vector<32x1xf32> to vector<32x128xf32>
    %14 = arith.addf %12, %13 : vector<32x128xf32>
    %cst_13 = arith.constant 0.000000e+00 : f32
    %15 = vector.broadcast %cst_13 : f32 to vector<32x128xf32>
    %16 = arith.maximumf %14, %15 : vector<32x128xf32>
    %17 = arith.truncf %16 : vector<32x128xf32> to vector<32x128xbf16>
    %c0_14 = arith.constant 0 : index
    %c0_15 = arith.constant 0 : index
    %c0_16 = arith.constant 0 : index
    %18 = vector.load %arg8[%c0_14, %c0_15, %c0_16] : memref<1x32x128xbf16, #tpu.memory_space<vmem>>, vector<1x32x128xbf16>
    %19 = vector.shape_cast %18 : vector<1x32x128xbf16> to vector<32x128xbf16>
    %20 = vector.shape_cast %17 : vector<32x128xbf16> to vector<1x32x128xbf16>
    tpu.vector_store %arg8[%c0_14, %c0_15, %c0_16], %20 {strides = array<i32>} : memref<1x32x128xbf16, #tpu.memory_space<vmem>>, vector<1x32x128xbf16>,
    %c0_17 = arith.constant 0 : index
    %c0_18 = arith.constant 0 : index
    %21 = vector.load %arg7[%c0_17, %c0_18] : memref<16x32xbf16, #tpu.memory_space<vmem>>, vector<16x32xbf16>
    %cst_19 = arith.constant dense<0.000000e+00> : vector<16x128xf32>
    %22 = tpu.matmul %21, %17, %cst_19 {dimension_numbers = #tpu.dot_dimension_numbers<[1], [0], [0], [1], [0, 0, 1, 1], [], []>} : vector<16x32xbf16>, vector<32x128xbf16>, vector<16x128xf32> -> vector<16x128xf32>
    %c128_i32 = arith.constant 128 : i32
    %23 = arith.muli %arg1, %c128_i32 : i32
    %24 = tpu.iota {dimensions = array<i32: 1>} : vector<1x128xi32>
    %25 = vector.broadcast %23 : i32 to vector<1x128xi32>
    %26 = arith.addi %25, %24 : vector<1x128xi32>
    %c16_i32 = arith.constant 16 : i32
    %27 = vector.broadcast %c16_i32 : i32 to vector<1x128xi32>
    %28 = arith.cmpi slt, %26, %27 : vector<1x128xi32>
    %29 = arith.extui %28 : vector<1x128xi1> to vector<1x128xi32>
    %30 = arith.sitofp %29 : vector<1x128xi32> to vector<1x128xf32>
    %31 = vector.broadcast %30 : vector<1x128xf32> to vector<16x128xf32>
    %32 = arith.mulf %22, %31 : vector<16x128xf32>
    %cst_20 = arith.constant dense<0.000000e+00> : vector<16xf32>
    %33 = vector.multi_reduction <add>, %32, %cst_20 [1] : vector<16x128xf32> to vector<16xf32>
    %34 = vector.shape_cast %33 : vector<16xf32> to vector<16x1xf32>
    %35 = arith.mulf %32, %32 : vector<16x128xf32>
    %cst_21 = arith.constant dense<0.000000e+00> : vector<16xf32>
    %36 = vector.multi_reduction <add>, %35, %cst_21 [1] : vector<16x128xf32> to vector<16xf32>
    %37 = vector.shape_cast %36 : vector<16xf32> to vector<16x1xf32>
    %38 = tpu.concatenate %34, %37 in 1 : vector<16x1xf32>, vector<16x1xf32> -> vector<16x2xf32>
    %c0_i32 = arith.constant 0 : i32
    %39 = arith.cmpi eq, %arg1, %c0_i32 : i32
    %40 = arith.extui %39 : i1 to i32
    %c0_i32_22 = arith.constant 0 : i32
    %41 = arith.cmpi ne, %40, %c0_i32_22 : i32
    scf.if %41 {
      %cst_29 = arith.constant 0.000000e+00 : f32
      %48 = vector.broadcast %cst_29 : f32 to vector<1x16x2xf32>
      %c0_30 = arith.constant 0 : index
      %c0_31 = arith.constant 0 : index
      %c0_32 = arith.constant 0 : index
      %49 = vector.load %arg9[%c0_30, %c0_31, %c0_32] : memref<1x16x2xf32, #tpu.memory_space<vmem>>, vector<1x16x2xf32>
      tpu.vector_store %arg9[%c0_30, %c0_31, %c0_32], %48 {strides = array<i32>} : memref<1x16x2xf32, #tpu.memory_space<vmem>>, vector<1x16x2xf32>,
    } else {
    }
    %c0_23 = arith.constant 0 : index
    %c0_24 = arith.constant 0 : index
    %c0_25 = arith.constant 0 : index
    %42 = vector.load %arg9[%c0_23, %c0_24, %c0_25] : memref<1x16x2xf32, #tpu.memory_space<vmem>>, vector<1x16x2xf32>
    %43 = vector.shape_cast %42 : vector<1x16x2xf32> to vector<16x2xf32>
    %44 = arith.addf %43, %38 : vector<16x2xf32>
    %c0_26 = arith.constant 0 : index
    %c0_27 = arith.constant 0 : index
    %c0_28 = arith.constant 0 : index
    %45 = vector.load %arg9[%c0_26, %c0_27, %c0_28] : memref<1x16x2xf32, #tpu.memory_space<vmem>>, vector<1x16x2xf32>
    %46 = vector.shape_cast %45 : vector<1x16x2xf32> to vector<16x2xf32>
    %47 = vector.shape_cast %44 : vector<16x2xf32> to vector<1x16x2xf32>
    tpu.vector_store %arg9[%c0_26, %c0_27, %c0_28], %47 {strides = array<i32>} : memref<1x16x2xf32, #tpu.memory_space<vmem>>, vector<1x16x2xf32>,
    return
  }
  func.func @transform_0(%arg0: i32, %arg1: i32) -> (i32, i32, i32) {
    %c0_i32 = arith.constant 0 : i32
    %c0_i32_0 = arith.constant 0 : i32
    return %arg0, %c0_i32, %arg1 : i32, i32, i32
  }
  func.func @transform_1(%arg0: i32, %arg1: i32) -> (i32, i32, i32) {
    %c0_i32 = arith.constant 0 : i32
    %c0_i32_0 = arith.constant 0 : i32
    return %arg0, %c0_i32, %arg1 : i32, i32, i32
  }
  func.func @transform_2(%arg0: i32, %arg1: i32) -> (i32, i32) {
    %c0_i32 = arith.constant 0 : i32
    %c0_i32_0 = arith.constant 0 : i32
    %c0_i32_1 = arith.constant 0 : i32
    return %c0_i32, %c0_i32_0 : i32, i32
  }
  func.func @transform_3(%arg0: i32, %arg1: i32) -> (i32, i32) {
    %c0_i32 = arith.constant 0 : i32
    %c0_i32_0 = arith.constant 0 : i32
    %c0_i32_1 = arith.constant 0 : i32
    return %c0_i32, %c0_i32_0 : i32, i32
  }
  func.func @transform_4(%arg0: i32, %arg1: i32) -> (i32, i32) {
    %c0_i32 = arith.constant 0 : i32
    %c0_i32_0 = arith.constant 0 : i32
    %c0_i32_1 = arith.constant 0 : i32
    return %c0_i32, %c0_i32_0 : i32, i32
  }
  func.func @transform_5(%arg0: i32, %arg1: i32) -> (i32, i32) {
    %c0_i32 = arith.constant 0 : i32
    %c0_i32_0 = arith.constant 0 : i32
    %c0_i32_1 = arith.constant 0 : i32
    return %c0_i32, %c0_i32_0 : i32, i32
  }
  func.func @transform_6(%arg0: i32, %arg1: i32) -> (i32, i32, i32) {
    %c0_i32 = arith.constant 0 : i32
    %c0_i32_0 = arith.constant 0 : i32
    return %arg0, %c0_i32, %arg1 : i32, i32, i32
  }
  func.func @transform_7(%arg0: i32, %arg1: i32) -> (i32, i32, i32) {
    %c0_i32 = arith.constant 0 : i32
    %c0_i32_0 = arith.constant 0 : i32
    %c0_i32_1 = arith.constant 0 : i32
    return %arg0, %c0_i32, %c0_i32_0 : i32, i32, i32
  }
}

module attributes {stable_mosaic.version = 11 : i64} {
  func.func @kernel(%arg0: i32, %arg1: i32, %arg2: memref<1x32x128xbf16, #tpu.memory_space<vmem>>, %arg3: memref<16x32xbf16, #tpu.memory_space<vmem>>, %arg4: memref<16x2xf32, #tpu.memory_space<vmem>>, %arg5: memref<1x16x128xf32, #tpu.memory_space<vmem>>) attributes {dimension_semantics = [#tpu.dimension_semantics<parallel>, #tpu.dimension_semantics<parallel>], iteration_bounds = array<i64: 2, 1>, scalar_prefetch = 0 : i64, scratch_operands = 0 : i64, tpu.core_type = #tpu.core_type<tc>, window_params = [{transform_indices = @transform_0, window_bounds = array<i64: 1, 32, 128>}, {pipeline_mode = #tpu.pipeline_mode<synchronous>, transform_indices = @transform_1, window_bounds = array<i64: 16, 32>}, {pipeline_mode = #tpu.pipeline_mode<synchronous>, transform_indices = @transform_2, window_bounds = array<i64: 16, 2>}, {transform_indices = @transform_3, window_bounds = array<i64: 1, 16, 128>}]} {
    %c0 = arith.constant 0 : index
    %c0_0 = arith.constant 0 : index
    %0 = vector.load %arg3[%c0, %c0_0] : memref<16x32xbf16, #tpu.memory_space<vmem>>, vector<16x32xbf16>
    %c0_1 = arith.constant 0 : index
    %c0_2 = arith.constant 0 : index
    %c0_3 = arith.constant 0 : index
    %1 = vector.load %arg2[%c0_1, %c0_2, %c0_3] : memref<1x32x128xbf16, #tpu.memory_space<vmem>>, vector<1x32x128xbf16>
    %2 = vector.shape_cast %1 : vector<1x32x128xbf16> to vector<32x128xbf16>
    %cst = arith.constant dense<0.000000e+00> : vector<16x128xf32>
    %3 = tpu.matmul %0, %2, %cst {dimension_numbers = #tpu.dot_dimension_numbers<[1], [0], [0], [1], [0, 0, 1, 1], [], []>} : vector<16x32xbf16>, vector<32x128xbf16>, vector<16x128xf32> -> vector<16x128xf32>
    %c0_4 = arith.constant 0 : index
    %c0_5 = arith.constant 0 : index
    %4 = vector.load %arg4[%c0_4, %c0_5] : memref<16x2xf32, #tpu.memory_space<vmem>>, vector<16x1xf32>
    %c0_6 = arith.constant 0 : index
    %c1 = arith.constant 1 : index
    %5 = vector.load %arg4[%c0_6, %c1] : memref<16x2xf32, #tpu.memory_space<vmem>>, vector<16x1xf32>
    %6 = vector.broadcast %4 : vector<16x1xf32> to vector<16x128xf32>
    %7 = arith.mulf %3, %6 : vector<16x128xf32>
    %8 = vector.broadcast %5 : vector<16x1xf32> to vector<16x128xf32>
    %9 = arith.addf %7, %8 : vector<16x128xf32>
    %cst_7 = arith.constant 0.000000e+00 : f32
    %10 = vector.broadcast %cst_7 : f32 to vector<16x128xf32>
    %11 = arith.maximumf %9, %10 : vector<16x128xf32>
    %c0_8 = arith.constant 0 : index
    %c0_9 = arith.constant 0 : index
    %c0_10 = arith.constant 0 : index
    %12 = vector.load %arg5[%c0_8, %c0_9, %c0_10] : memref<1x16x128xf32, #tpu.memory_space<vmem>>, vector<1x16x128xf32>
    %13 = vector.shape_cast %12 : vector<1x16x128xf32> to vector<16x128xf32>
    %14 = vector.shape_cast %11 : vector<16x128xf32> to vector<1x16x128xf32>
    tpu.vector_store %arg5[%c0_8, %c0_9, %c0_10], %14 {strides = array<i32>} : memref<1x16x128xf32, #tpu.memory_space<vmem>>, vector<1x16x128xf32>,
    return
  }
  func.func @transform_0(%arg0: i32, %arg1: i32) -> (i32, i32, i32) {
    %c0_i32 = arith.constant 0 : i32
    %c0_i32_0 = arith.constant 0 : i32
    return %arg0, %c0_i32, %arg1 : i32, i32, i32
  }
  func.func @transform_1(%arg0: i32, %arg1: i32) -> (i32, i32) {
    %c0_i32 = arith.constant 0 : i32
    %c0_i32_0 = arith.constant 0 : i32
    %c0_i32_1 = arith.constant 0 : i32
    return %c0_i32, %c0_i32_0 : i32, i32
  }
  func.func @transform_2(%arg0: i32, %arg1: i32) -> (i32, i32) {
    %c0_i32 = arith.constant 0 : i32
    %c0_i32_0 = arith.constant 0 : i32
    %c0_i32_1 = arith.constant 0 : i32
    return %c0_i32, %c0_i32_0 : i32, i32
  }
  func.func @transform_3(%arg0: i32, %arg1: i32) -> (i32, i32, i32) {
    %c0_i32 = arith.constant 0 : i32
    %c0_i32_0 = arith.constant 0 : i32
    return %arg0, %c0_i32, %arg1 : i32, i32, i32
  }
}

</mosaic_0001>

<llo_original>
// kernel: feature_propagation_forward.5
$region0: #{feature_propagation_forward.5}
  #allocation0 [shape = 'u32[]', space=smem, size = 0x4, offset = 0x4, fixed_abs, tag = 'smem constant byte address 0x4 - core index']
  #allocation1 [shape = 'u32[144,128]{1,0:T(1,128)}', space=vmem, size = 0x12000, scoped, tag = 'internal scratch']
  %s0 = inlined_call_operand.vmem [shape: bf16[2,32,128], index: 0, kind: input, shape index: {}]
  %s1 = inlined_call_operand.vmem [shape: bf16[16,32], index: 1, kind: input, shape index: {}]
  %s2 = inlined_call_operand.vmem [shape: f32[16,2], index: 2, kind: input, shape index: {}]
  %s3 = inlined_call_operand.hbm [shape: f32[2,16,128], index: 3, kind: output, shape index: {}]
  %s4 = sld [smem:[#allocation0]]
  $region45: #{feature_propagation_forward.5} parent=0
    _
  %s6 = ssub.s32 1, %s4
  %s7 = scalar_select 0, %s6, %s4
  $region1: #{feature_propagation_forward.5} parent=0
    #allocation2 [shape = 'u8[16384]{0}', space=vmem, size = 0x4000, scoped, tag = 'output window, operand 0']
    #allocation3 [shape = 's32[2]{0}', space=sflag, size = 0x8, scoped, tag = 'scoped memory for feature_propagation_forward.5']
    %8 = vsyncpa [#allocation3], 0
    %s9 = scalar_lea.sflag [#allocation3], 1
    %10 = vsyncpa %s9, 0
    loop: start=0, step=1, limit=4
    $region2: #{feature_propagation_forward.5} parent=1 // loop_pre_header
      _
    $region3: #{feature_propagation_forward.5} parent=1 // loop_header
      %s12 = sphi 0, %s16
      %p13 = scmp.ge.s32.totalorder %s12, 4
      %s19 = sphi 0, %s31
      %s20 = sphi 0, %s27
      %s21 = sphi 0, %s19
      %s22 = sphi 0, %s20
      %s23 = sphi 0, %s21
      %s24 = sphi 0, %s22
      %s36 = sphi 0, %s38
      %s39 = sphi 0, %s36
      %s40 = sphi 0, %s39
      %s56 = sphi 0, %s40
      %s60 = sphi 0, %s60
      %s62 = sphi 0, %s60
      %s63 = sphi 0, %s62
      %s77 = sphi 0, %s63
      %s81 = sphi 0, %s81
      %s83 = sphi 0, %s81
      %s84 = sphi 0, %s83
      %s98 = sphi 0, %s84
      %s106 = sphi 0, %s108
      %s109 = sphi 0, %s106
      %s110 = sphi 0, %s109
      %s126 = sphi 0, %s110
    $region4: #{feature_propagation_forward.5} parent=1 // loop_header_branch
      %15 = sbr.rel (%p13) target = $region8
    $region5: #{feature_propagation_forward.5} parent=1 // loop_body
      %s17 = ssub.s32 %s12, 1
      %s18 = ssub.s32 %s12, 2
      %s25 = sadd.s32 1, %s20
      %p26 = scmp.ge.s32.totalorder %s25, 1
      %s27 = scalar_select %p26, 0, %s25
      %s28 = sadd.s32 1, %s19
      %s29 = scalar_select %p26, %s28, %s19
      %p30 = scmp.ge.s32.totalorder %s29, 2
      %s31 = scalar_select %p30, 0, %s29
      %s32 = ssub.s32 %s19, %s31
      %s33 = ssub.s32 %s20, %s27
      %s34 = sor.u32 %s32, %s33
      %p35 = scmp.eq.s32.totalorder %s34, 0
      %s37 = sadd.s32 %s36, 1
      %s38 = scalar_select %p35, %s36, %s37
      %p41 = pneg %p35
      %p42 = scmp.eq.s32.totalorder %s12, 1
      %p43 = por %p41, %p42
      %p44 = scmp.ne.s32.totalorder %s36, %s39
      %p45 = scmp.eq.s32.totalorder %s12, 0
      %p46 = por %p44, %p45
      %p47 = scmp.ne.s32.totalorder %s36, %s39
      %p48 = scmp.eq.s32.totalorder %s17, 1
      %p49 = por %p47, %p48
      %p50 = scmp.ne.s32.totalorder %s39, %s40
      %p51 = scmp.eq.s32.totalorder %s17, 0
      %p52 = por %p50, %p51
      %p53 = scmp.ne.s32.totalorder %s39, %s40
      %p54 = scmp.eq.s32.totalorder %s18, 1
      %p55 = por %p53, %p54
      %p57 = scmp.ne.s32.totalorder %s40, %s56
      %p58 = scmp.eq.s32.totalorder %s18, 0
      %p59 = por %p57, %p58
      %s61 = sadd.s32 %s60, 1
      %p64 = scmp.eq.s32.totalorder %s12, 1
      %p65 = scmp.ne.s32.totalorder %s60, %s62
      %p66 = scmp.eq.s32.totalorder %s12, 0
      %p67 = por %p65, %p66
      %p68 = scmp.ne.s32.totalorder %s60, %s62
      %p69 = scmp.eq.s32.totalorder %s17, 1
      %p70 = por %p68, %p69
      %p71 = scmp.ne.s32.totalorder %s62, %s63
      %p72 = scmp.eq.s32.totalorder %s17, 0
      %p73 = por %p71, %p72
      %p74 = scmp.ne.s32.totalorder %s62, %s63
      %p75 = scmp.eq.s32.totalorder %s18, 1
      %p76 = por %p74, %p75
      %p78 = scmp.ne.s32.totalorder %s63, %s77
      %p79 = scmp.eq.s32.totalorder %s18, 0
      %p80 = por %p78, %p79
      %s82 = sadd.s32 %s81, 1
      %p85 = scmp.eq.s32.totalorder %s12, 1
      %p86 = scmp.ne.s32.totalorder %s81, %s83
      %p87 = scmp.eq.s32.totalorder %s12, 0
      %p88 = por %p86, %p87
      %p89 = scmp.ne.s32.totalorder %s81, %s83
      %p90 = scmp.eq.s32.totalorder %s17, 1
      %p91 = por %p89, %p90
      %p92 = scmp.ne.s32.totalorder %s83, %s84
      %p93 = scmp.eq.s32.totalorder %s17, 0
      %p94 = por %p92, %p93
      %p95 = scmp.ne.s32.totalorder %s83, %s84
      %p96 = scmp.eq.s32.totalorder %s18, 1
      %p97 = por %p95, %p96
      %p99 = scmp.ne.s32.totalorder %s84, %s98
      %p100 = scmp.eq.s32.totalorder %s18, 0
      %p101 = por %p99, %p100
      %s102 = ssub.s32 %s19, %s31
      %s103 = ssub.s32 %s20, %s27
      %s104 = sor.u32 %s102, %s103
      %p105 = scmp.eq.s32.totalorder %s104, 0
      %s107 = sadd.s32 %s106, 1
      %s108 = scalar_select %p105, %s106, %s107
      %p111 = pneg %p105
      %p112 = scmp.eq.s32.totalorder %s12, 1
      %p113 = por %p111, %p112
      %p114 = scmp.ne.s32.totalorder %s106, %s109
      %p115 = scmp.eq.s32.totalorder %s12, 0
      %p116 = por %p114, %p115
      %p117 = scmp.ne.s32.totalorder %s106, %s109
      %p118 = scmp.eq.s32.totalorder %s17, 1
      %p119 = por %p117, %p118
      %p120 = scmp.ne.s32.totalorder %s109, %s110
      %p121 = scmp.eq.s32.totalorder %s17, 0
      %p122 = por %p120, %p121
      %p123 = scmp.ne.s32.totalorder %s109, %s110
      %p124 = scmp.eq.s32.totalorder %s18, 1
      %p125 = por %p123, %p124
      %p127 = scmp.ne.s32.totalorder %s110, %s126
      %p128 = scmp.eq.s32.totalorder %s18, 0
      %p129 = por %p127, %p128
      %p130 = scmp.le.s32.totalorder 1, %s12
      %p131 = scmp.lt.s32.totalorder %s12, 3
      %p132 = pnand %p130, %p131
      %p133 = pneg %p132
      // Predicated region
      $region9: #{feature_propagation_forward.5} parent=5 // pred_check
        _
      $region10: #{feature_propagation_forward.5} parent=5 // pred_check_branch
        %135 = sbr.rel (%p132) target = $region12
      $region11: #{feature_propagation_forward.5} parent=5 // pred_region
        %s136 = ssub.s32 %s12, 1
        // Predicated region
        $region13: #{feature_propagation_forward.5} parent=11 // pred_check
          %p137 = pneg %p73
        $region14: #{feature_propagation_forward.5} parent=11 // pred_check_branch
          %139 = sbr.rel (%p137) target = $region16
        $region15: #{feature_propagation_forward.5} parent=11 // pred_region
          _
        $region16: #{feature_propagation_forward.5} parent=11 // pred_fallthru
          _
        // Predicated region
        $region17: #{feature_propagation_forward.5} parent=11 // pred_check
          %p140 = pneg %p94
        $region18: #{feature_propagation_forward.5} parent=11 // pred_check_branch
          %142 = sbr.rel (%p140) target = $region20
        $region19: #{feature_propagation_forward.5} parent=11 // pred_region
          _
        $region20: #{feature_propagation_forward.5} parent=11 // pred_fallthru
          _
      $region12: #{feature_propagation_forward.5} parent=5 // pred_fallthru
        _
      %p143 = scmp.lt.s32.totalorder %s12, 2
      // Predicated region
      $region21: #{feature_propagation_forward.5} parent=5 // pred_check
        %p144 = pneg %p143
      $region22: #{feature_propagation_forward.5} parent=5 // pred_check_branch
        %146 = sbr.rel (%p144) target = $region24
      $region23: #{feature_propagation_forward.5} parent=5 // pred_region
        // Predicated region
        $region25: #{feature_propagation_forward.5} parent=23 // pred_check
          %p147 = pneg %p46
        $region26: #{feature_propagation_forward.5} parent=23 // pred_check_branch
          %149 = sbr.rel (%p147) target = $region28
        $region27: #{feature_propagation_forward.5} parent=23 // pred_region
          %p150 = scmp.lt.s32.totalorder %s19, 1
          %s151 = scalar_select %p150, %s19, 1
          %p152 = scmp.lt.s32.totalorder %s20, 0
          %s153 = scalar_select %p152, %s20, 0
          %s154 = smul.addr %s151, 4
          %s155 = sadd.s32 %s153, %s154
          %s156 = smul.addr %s155, 4
          %s157 = scalar_lea.vmem %s0, %s156
        $region28: #{feature_propagation_forward.5} parent=23 // pred_fallthru
          _
      $region24: #{feature_propagation_forward.5} parent=5 // pred_fallthru
        _
      %p158 = scmp.le.s32.totalorder 1, %s12
      %p159 = scmp.lt.s32.totalorder %s12, 3
      %p160 = pnand %p158, %p159
      %p161 = pneg %p160
      // Predicated region
      $region29: #{feature_propagation_forward.5} parent=5 // pred_check
        _
      $region30: #{feature_propagation_forward.5} parent=5 // pred_check_branch
        %163 = sbr.rel (%p160) target = $region32
      $region31: #{feature_propagation_forward.5} parent=5 // pred_region
        %s164 = ssub.s32 %s12, 1
        %p165 = scmp.lt.s32.totalorder %s21, 1
        %s166 = scalar_select %p165, %s21, 1
        %p167 = scmp.lt.s32.totalorder %s22, 0
        %s168 = scalar_select %p167, %s22, 0
        %s169 = smul.addr %s166, 4
        %s170 = sadd.s32 %s168, %s169
        %s171 = smul.addr %s170, 4
        %s172 = scalar_lea.vmem %s0, %s171
        %p173 = pneg %p52
        %p174 = pneg %p49
        %p175 = pneg %p73
        %p176 = pneg %p70
        %p177 = pneg %p94
        %p178 = pneg %p91
        %p179 = pneg %p122
        %p180 = pneg %p119
        %s181 = sand.u32 %s109, 1
        %s182 = scalar_lea.sflag [#allocation3], %s181
        %s183 = sand.u32 %s109, 1
        %s184 = smul.addr %s183, 16
        %s185 = scalar_lea.vmem [#allocation2], %s184
        %p186 = scmp.lt.s32.totalorder %s21, 1
        %s187 = scalar_select %p186, %s21, 1
        %p188 = scmp.lt.s32.totalorder %s22, 0
        %s189 = scalar_select %p188, %s22, 0
        %s190 = smul.addr %s187, 4
        %s191 = sadd.s32 %s189, %s190
        %s192 = smul.addr %s191, 4
        %s193 = scalar_lea.vmem %s0, %s192
        %v195 = vld [vmem:[%s1] sm:$0xf]
        %v196 = vld [vmem:[%s1 + $0x4] sm:$0xf]
        %v197 = vld [vmem:[%s193] sm:$0xf]
        %v198 = vld [vmem:[%s193 + $0x4] sm:$0xf]
        %v199 = vld [vmem:[%s193 + $0x8] sm:$0xf]
        %v200 = vld [vmem:[%s193 + $0xc] sm:$0xf]
        %v203 = vunpack.c.l.b16 %v195
        %v204 = vunpack.c.l.b16 %v196
        %v205 = vpack.c.b16 %v204, %v203
        %v210 = vunpack.c.l.b16 %v197
        %v211 = vunpack.c.l.b16 %v198
        %v212 = vunpack.c.l.b16 %v199
        %v213 = vunpack.c.l.b16 %v200
        %v214 = vpack.c.b16 %v211, %v210
        %v215 = vpack.c.b16 %v213, %v212
        %vm218 = vcmask 261120
        %v220 = vsel %vm218, %v205, 0
        %222 = vmatprep.subr.bf16.mxu0 0
        %223 = vmatpush1.bf16.msra.mxu0 0
        %224 = vmatprep.subr.bf16.mxu0 0
        %225 = vmatpush1.bf16.msra.mxu0 0
        %226 = vmatprep.subr.bf16.mxu0 0
        %227 = vmatpush1.bf16.msra.mxu0 0
        %228 = vmatprep.subr.bf16.mxu0 0
        %229 = vmatpush1.bf16.msra.mxu0 0
        %230 = vmatprep.subr.bf16.mxu0 0
        %231 = vmatpush1.bf16.msra.mxu0 0
        %232 = vmatprep.subr.bf16.mxu0 0
        %233 = vmatpush1.bf16.msra.mxu0 0
        %234 = vmatprep.subr.bf16.mxu0 0
        %235 = vmatpush1.bf16.msra.mxu0 %v215
        %236 = vmatprep.subr.bf16.mxu0 0
        %237 = vmatpush1.bf16.msra.mxu0 %v214
        %238 = vmatprep.subr.bf16.mxu0 0
        %239 = vmatpush2.bf16.msra.mxu0 0
        %240 = vmatprep.subr.bf16.mxu0 0
        %241 = vmatpush2.bf16.msra.mxu0 0
        %242 = vmatprep.subr.bf16.mxu0 0
        %243 = vmatpush2.bf16.msra.mxu0 0
        %244 = vmatprep.subr.bf16.mxu0 0
        %245 = vmatpush2.bf16.msra.mxu0 0
        %246 = vmatprep.subr.bf16.mxu0 0
        %247 = vmatpush2.bf16.msra.mxu0 0
        %248 = vmatprep.subr.bf16.mxu0 0
        %249 = vmatpush2.bf16.msra.mxu0 0
        %250 = vmatprep.subr.bf16.mxu0 0
        %251 = vmatpush2.bf16.msra.mxu0 0
        %252 = vmatprep.subr.bf16.mxu0 0
        %253 = vmatpush2.bf16.msra.mxu0 0
        %254 = vmatprep.mubr.bf16.mxu0 0
        %255 = vmatmul.mubr.bf16.gmra.mxu0 %v220
        %v256 = vpop.f32.mrf.mxu0
        %v257 = vadd.f32 0.0, %v256
        %v258 = vpop.f32.mrf.mxu0
        %v259 = vpop.f32.mrf.mxu0
        %v260 = vadd.f32 0.0, %v259
        %v261 = vpop.f32.mrf.mxu0
        %262 = vdwg.mxu0
        %v263 = vld [vmem:[%s2] sm:$0xff]
        %v264 = vld [vmem:[%s2 + $0x8] sm:$0xff]
        %266 = vset.pattern.permute.xlu0 0
        %267 = vperm.xlu0 %266, %v263
        %v268 = vpop.permute.xlu0 %267
        %271 = vset.pattern.permute.xlu0 0
        %272 = vperm.xlu0 %271, %v264
        %v273 = vpop.permute.xlu0 %272
        %v275 = vmul.f32 %v257, %v268
        %v276 = vmul.f32 %v260, %v273
        %277 = vset.pattern.permute.xlu0 1
        %278 = vperm.xlu0 %277, %v263
        %v279 = vpop.permute.xlu0 %278
        %281 = vset.pattern.permute.xlu0 1
        %282 = vperm.xlu0 %281, %v264
        %v283 = vpop.permute.xlu0 %282
        %v285 = vadd.f32 %v275, %v279
        %v286 = vadd.f32 %v276, %v283
        %v287 = vmax.f32 %v285, 0.0
        %v288 = vmax.f32 %v286, 0.0
        %289 = vst [vmem:[%s185] sm:$0xff] %v287
        %290 = vst [vmem:[%s185 + $0x8] sm:$0xff] %v288
        %s291 = sand.u32 %s109, 1
        %s292 = scalar_lea.sflag [#allocation3], %s291
        %s293 = sand.u32 %s109, 1
        %s294 = smul.addr %s293, 16
        %s295 = scalar_lea.vmem [#allocation2], %s294
        // Predicated region
        $region33: #{feature_propagation_forward.5} parent=31 // pred_check
          %p296 = pneg %p119
        $region34: #{feature_propagation_forward.5} parent=31 // pred_check_branch
          %298 = sbr.rel (%p296) target = $region36
        $region35: #{feature_propagation_forward.5} parent=31 // pred_region
          %s300 = ssub.s32 256, 256
          %301 = vsyncadd %s292, %s300
          %s302 = smul.addr %s21, 2
          %s303 = sadd.s32 %s22, %s302
          %s304 = smul.addr %s303, 128
          %s305 = scalar_lea.hbm %s3, %s304
          %s306 = sshll.u32 %s295, 4
          %s307 = int_to_ptr.vmem [resolvable:$true] %s306
          %312 = dma.vmem_to_hbm [thread:$0]  %s307, 256, %s305, %s292, 128, 128, 8
        $region36: #{feature_propagation_forward.5} parent=31 // pred_fallthru
          _
      $region32: #{feature_propagation_forward.5} parent=5 // pred_fallthru
        _
      %p313 = scmp.le.s32.totalorder 2, %s12
      // Predicated region
      $region37: #{feature_propagation_forward.5} parent=5 // pred_check
        %p314 = pneg %p313
      $region38: #{feature_propagation_forward.5} parent=5 // pred_check_branch
        %316 = sbr.rel (%p314) target = $region40
      $region39: #{feature_propagation_forward.5} parent=5 // pred_region
        %s317 = ssub.s32 %s12, 2
        // Predicated region
        $region41: #{feature_propagation_forward.5} parent=39 // pred_check
          %p318 = pneg %p125
        $region42: #{feature_propagation_forward.5} parent=39 // pred_check_branch
          %320 = sbr.rel (%p318) target = $region44
        $region43: #{feature_propagation_forward.5} parent=39 // pred_region
          %s321 = sand.u32 %s110, 1
          %s322 = scalar_lea.sflag [#allocation3], %s321
          %s323 = sand.u32 %s110, 1
          %s324 = smul.addr %s323, 16
          %s325 = scalar_lea.vmem [#allocation2], %s324
          %326 = dma.done %s322, 256
        $region44: #{feature_propagation_forward.5} parent=39 // pred_fallthru
          _
      $region40: #{feature_propagation_forward.5} parent=5 // pred_fallthru
        _
    $region6: #{feature_propagation_forward.5} parent=1 // loop_footer
      %s16 = sadd.s32 1, %s12
    $region7: #{feature_propagation_forward.5} parent=1 // loop_footer_branch
      %11 = sbr.rel target = $region3
    $region8: #{feature_propagation_forward.5} parent=1 // loop_exit
      _
    %327 = vsyncpa [#allocation3], 1
    %s328 = scalar_lea.sflag [#allocation3], 1
    %329 = vsyncpa %s328, 1

// kernel: feature_propagation_forward.4
$region0: #{feature_propagation_forward.4}
  #allocation0 [shape = 'u32[]', space=smem, size = 0x4, offset = 0x4, fixed_abs, tag = 'smem constant byte address 0x4 - core index']
  #allocation1 [shape = 'u32[144,128]{1,0:T(1,128)}', space=vmem, size = 0x12000, scoped, tag = 'internal scratch']
  %s0 = inlined_call_operand.vmem [shape: bf16[2,6,128], index: 0, kind: input, shape index: {}]
  %s1 = inlined_call_operand.vmem [shape: bf16[2,8,128], index: 1, kind: input, shape index: {}]
  %s2 = inlined_call_operand.vmem [shape: bf16[32,6], index: 2, kind: input, shape index: {}]
  %s3 = inlined_call_operand.vmem [shape: bf16[32,8], index: 3, kind: input, shape index: {}]
  %s4 = inlined_call_operand.vmem [shape: f32[32,2], index: 4, kind: input, shape index: {}]
  %s5 = inlined_call_operand.vmem [shape: bf16[16,32], index: 5, kind: input, shape index: {}]
  %s6 = inlined_call_operand.vmem [shape: bf16[2,32,128], index: 6, kind: output, shape index: {0}]
  %s7 = inlined_call_operand.vmem [shape: f32[2,16,2], index: 7, kind: output, shape index: {1}]
  %8 = xla_tuple %s6, %s7
  %s9 = sld [smem:[#allocation0]]
  $region69: #{feature_propagation_forward.4} parent=0
    _
  %s11 = ssub.s32 1, %s9
  %s12 = scalar_select 0, %s11, %s9
  loop: start=0, step=1, limit=4
  $region2: #{feature_propagation_forward.4} parent=0 // loop_pre_header
    _
  $region3: #{feature_propagation_forward.4} parent=0 // loop_header
    %s14 = sphi 0, %s18
    %p15 = scmp.ge.s32.totalorder %s14, 4
    %s21 = sphi 0, %s33
    %s22 = sphi 0, %s29
    %s23 = sphi 0, %s21
    %s24 = sphi 0, %s22
    %s25 = sphi 0, %s23
    %s26 = sphi 0, %s24
    %s38 = sphi 0, %s40
    %s41 = sphi 0, %s38
    %s42 = sphi 0, %s41
    %s58 = sphi 0, %s42
    %s66 = sphi 0, %s68
    %s69 = sphi 0, %s66
    %s70 = sphi 0, %s69
    %s86 = sphi 0, %s70
    %s90 = sphi 0, %s90
    %s92 = sphi 0, %s90
    %s93 = sphi 0, %s92
    %s107 = sphi 0, %s93
    %s111 = sphi 0, %s111
    %s113 = sphi 0, %s111
    %s114 = sphi 0, %s113
    %s128 = sphi 0, %s114
    %s132 = sphi 0, %s132
    %s134 = sphi 0, %s132
    %s135 = sphi 0, %s134
    %s149 = sphi 0, %s135
    %s153 = sphi 0, %s153
    %s155 = sphi 0, %s153
    %s156 = sphi 0, %s155
    %s170 = sphi 0, %s156
    %s178 = sphi 0, %s180
    %s181 = sphi 0, %s178
    %s182 = sphi 0, %s181
    %s198 = sphi 0, %s182
    %s204 = sphi 0, %s206
    %s207 = sphi 0, %s204
    %s208 = sphi 0, %s207
    %s224 = sphi 0, %s208
  $region4: #{feature_propagation_forward.4} parent=0 // loop_header_branch
    %17 = sbr.rel (%p15) target = $region8
  $region5: #{feature_propagation_forward.4} parent=0 // loop_body
    %s19 = ssub.s32 %s14, 1
    %s20 = ssub.s32 %s14, 2
    %s27 = sadd.s32 1, %s22
    %p28 = scmp.ge.s32.totalorder %s27, 1
    %s29 = scalar_select %p28, 0, %s27
    %s30 = sadd.s32 1, %s21
    %s31 = scalar_select %p28, %s30, %s21
    %p32 = scmp.ge.s32.totalorder %s31, 2
    %s33 = scalar_select %p32, 0, %s31
    %s34 = ssub.s32 %s21, %s33
    %s35 = ssub.s32 %s22, %s29
    %s36 = sor.u32 %s34, %s35
    %p37 = scmp.eq.s32.totalorder %s36, 0
    %s39 = sadd.s32 %s38, 1
    %s40 = scalar_select %p37, %s38, %s39
    %p43 = pneg %p37
    %p44 = scmp.eq.s32.totalorder %s14, 1
    %p45 = por %p43, %p44
    %p46 = scmp.ne.s32.totalorder %s38, %s41
    %p47 = scmp.eq.s32.totalorder %s14, 0
    %p48 = por %p46, %p47
    %p49 = scmp.ne.s32.totalorder %s38, %s41
    %p50 = scmp.eq.s32.totalorder %s19, 1
    %p51 = por %p49, %p50
    %p52 = scmp.ne.s32.totalorder %s41, %s42
    %p53 = scmp.eq.s32.totalorder %s19, 0
    %p54 = por %p52, %p53
    %p55 = scmp.ne.s32.totalorder %s41, %s42
    %p56 = scmp.eq.s32.totalorder %s20, 1
    %p57 = por %p55, %p56
    %p59 = scmp.ne.s32.totalorder %s42, %s58
    %p60 = scmp.eq.s32.totalorder %s20, 0
    %p61 = por %p59, %p60
    %s62 = ssub.s32 %s21, %s33
    %s63 = ssub.s32 %s22, %s29
    %s64 = sor.u32 %s62, %s63
    %p65 = scmp.eq.s32.totalorder %s64, 0
    %s67 = sadd.s32 %s66, 1
    %s68 = scalar_select %p65, %s66, %s67
    %p71 = pneg %p65
    %p72 = scmp.eq.s32.totalorder %s14, 1
    %p73 = por %p71, %p72
    %p74 = scmp.ne.s32.totalorder %s66, %s69
    %p75 = scmp.eq.s32.totalorder %s14, 0
    %p76 = por %p74, %p75
    %p77 = scmp.ne.s32.totalorder %s66, %s69
    %p78 = scmp.eq.s32.totalorder %s19, 1
    %p79 = por %p77, %p78
    %p80 = scmp.ne.s32.totalorder %s69, %s70
    %p81 = scmp.eq.s32.totalorder %s19, 0
    %p82 = por %p80, %p81
    %p83 = scmp.ne.s32.totalorder %s69, %s70
    %p84 = scmp.eq.s32.totalorder %s20, 1
    %p85 = por %p83, %p84
    %p87 = scmp.ne.s32.totalorder %s70, %s86
    %p88 = scmp.eq.s32.totalorder %s20, 0
    %p89 = por %p87, %p88
    %s91 = sadd.s32 %s90, 1
    %p94 = scmp.eq.s32.totalorder %s14, 1
    %p95 = scmp.ne.s32.totalorder %s90, %s92
    %p96 = scmp.eq.s32.totalorder %s14, 0
    %p97 = por %p95, %p96
    %p98 = scmp.ne.s32.totalorder %s90, %s92
    %p99 = scmp.eq.s32.totalorder %s19, 1
    %p100 = por %p98, %p99
    %p101 = scmp.ne.s32.totalorder %s92, %s93
    %p102 = scmp.eq.s32.totalorder %s19, 0
    %p103 = por %p101, %p102
    %p104 = scmp.ne.s32.totalorder %s92, %s93
    %p105 = scmp.eq.s32.totalorder %s20, 1
    %p106 = por %p104, %p105
    %p108 = scmp.ne.s32.totalorder %s93, %s107
    %p109 = scmp.eq.s32.totalorder %s20, 0
    %p110 = por %p108, %p109
    %s112 = sadd.s32 %s111, 1
    %p115 = scmp.eq.s32.totalorder %s14, 1
    %p116 = scmp.ne.s32.totalorder %s111, %s113
    %p117 = scmp.eq.s32.totalorder %s14, 0
    %p118 = por %p116, %p117
    %p119 = scmp.ne.s32.totalorder %s111, %s113
    %p120 = scmp.eq.s32.totalorder %s19, 1
    %p121 = por %p119, %p120
    %p122 = scmp.ne.s32.totalorder %s113, %s114
    %p123 = scmp.eq.s32.totalorder %s19, 0
    %p124 = por %p122, %p123
    %p125 = scmp.ne.s32.totalorder %s113, %s114
    %p126 = scmp.eq.s32.totalorder %s20, 1
    %p127 = por %p125, %p126
    %p129 = scmp.ne.s32.totalorder %s114, %s128
    %p130 = scmp.eq.s32.totalorder %s20, 0
    %p131 = por %p129, %p130
    %s133 = sadd.s32 %s132, 1
    %p136 = scmp.eq.s32.totalorder %s14, 1
    %p137 = scmp.ne.s32.totalorder %s132, %s134
    %p138 = scmp.eq.s32.totalorder %s14, 0
    %p139 = por %p137, %p138
    %p140 = scmp.ne.s32.totalorder %s132, %s134
    %p141 = scmp.eq.s32.totalorder %s19, 1
    %p142 = por %p140, %p141
    %p143 = scmp.ne.s32.totalorder %s134, %s135
    %p144 = scmp.eq.s32.totalorder %s19, 0
    %p145 = por %p143, %p144
    %p146 = scmp.ne.s32.totalorder %s134, %s135
    %p147 = scmp.eq.s32.totalorder %s20, 1
    %p148 = por %p146, %p147
    %p150 = scmp.ne.s32.totalorder %s135, %s149
    %p151 = scmp.eq.s32.totalorder %s20, 0
    %p152 = por %p150, %p151
    %s154 = sadd.s32 %s153, 1
    %p157 = scmp.eq.s32.totalorder %s14, 1
    %p158 = scmp.ne.s32.totalorder %s153, %s155
    %p159 = scmp.eq.s32.totalorder %s14, 0
    %p160 = por %p158, %p159
    %p161 = scmp.ne.s32.totalorder %s153, %s155
    %p162 = scmp.eq.s32.totalorder %s19, 1
    %p163 = por %p161, %p162
    %p164 = scmp.ne.s32.totalorder %s155, %s156
    %p165 = scmp.eq.s32.totalorder %s19, 0
    %p166 = por %p164, %p165
    %p167 = scmp.ne.s32.totalorder %s155, %s156
    %p168 = scmp.eq.s32.totalorder %s20, 1
    %p169 = por %p167, %p168
    %p171 = scmp.ne.s32.totalorder %s156, %s170
    %p172 = scmp.eq.s32.totalorder %s20, 0
    %p173 = por %p171, %p172
    %s174 = ssub.s32 %s21, %s33
    %s175 = ssub.s32 %s22, %s29
    %s176 = sor.u32 %s174, %s175
    %p177 = scmp.eq.s32.totalorder %s176, 0
    %s179 = sadd.s32 %s178, 1
    %s180 = scalar_select %p177, %s178, %s179
    %p183 = pneg %p177
    %p184 = scmp.eq.s32.totalorder %s14, 1
    %p185 = por %p183, %p184
    %p186 = scmp.ne.s32.totalorder %s178, %s181
    %p187 = scmp.eq.s32.totalorder %s14, 0
    %p188 = por %p186, %p187
    %p189 = scmp.ne.s32.totalorder %s178, %s181
    %p190 = scmp.eq.s32.totalorder %s19, 1
    %p191 = por %p189, %p190
    %p192 = scmp.ne.s32.totalorder %s181, %s182
    %p193 = scmp.eq.s32.totalorder %s19, 0
    %p194 = por %p192, %p193
    %p195 = scmp.ne.s32.totalorder %s181, %s182
    %p196 = scmp.eq.s32.totalorder %s20, 1
    %p197 = por %p195, %p196
    %p199 = scmp.ne.s32.totalorder %s182, %s198
    %p200 = scmp.eq.s32.totalorder %s20, 0
    %p201 = por %p199, %p200
    %s202 = ssub.s32 %s21, %s33
    %p203 = scmp.eq.s32.totalorder %s202, 0
    %s205 = sadd.s32 %s204, 1
    %s206 = scalar_select %p203, %s204, %s205
    %p209 = pneg %p203
    %p210 = scmp.eq.s32.totalorder %s14, 1
    %p211 = por %p209, %p210
    %p212 = scmp.ne.s32.totalorder %s204, %s207
    %p213 = scmp.eq.s32.totalorder %s14, 0
    %p214 = por %p212, %p213
    %p215 = scmp.ne.s32.totalorder %s204, %s207
    %p216 = scmp.eq.s32.totalorder %s19, 1
    %p217 = por %p215, %p216
    %p218 = scmp.ne.s32.totalorder %s207, %s208
    %p219 = scmp.eq.s32.totalorder %s19, 0
    %p220 = por %p218, %p219
    %p221 = scmp.ne.s32.totalorder %s207, %s208
    %p222 = scmp.eq.s32.totalorder %s20, 1
    %p223 = por %p221, %p222
    %p225 = scmp.ne.s32.totalorder %s208, %s224
    %p226 = scmp.eq.s32.totalorder %s20, 0
    %p227 = por %p225, %p226
    %p228 = scmp.le.s32.totalorder 1, %s14
    %p229 = scmp.lt.s32.totalorder %s14, 3
    %p230 = pnand %p228, %p229
    %p231 = pneg %p230
    // Predicated region
    $region9: #{feature_propagation_forward.4} parent=5 // pred_check
      _
    $region10: #{feature_propagation_forward.4} parent=5 // pred_check_branch
      %233 = sbr.rel (%p230) target = $region12
    $region11: #{feature_propagation_forward.4} parent=5 // pred_region
      %s234 = ssub.s32 %s14, 1
      // Predicated region
      $region13: #{feature_propagation_forward.4} parent=11 // pred_check
        %p235 = pneg %p103
      $region14: #{feature_propagation_forward.4} parent=11 // pred_check_branch
        %237 = sbr.rel (%p235) target = $region16
      $region15: #{feature_propagation_forward.4} parent=11 // pred_region
        _
      $region16: #{feature_propagation_forward.4} parent=11 // pred_fallthru
        _
      // Predicated region
      $region17: #{feature_propagation_forward.4} parent=11 // pred_check
        %p238 = pneg %p124
      $region18: #{feature_propagation_forward.4} parent=11 // pred_check_branch
        %240 = sbr.rel (%p238) target = $region20
      $region19: #{feature_propagation_forward.4} parent=11 // pred_region
        _
      $region20: #{feature_propagation_forward.4} parent=11 // pred_fallthru
        _
      // Predicated region
      $region21: #{feature_propagation_forward.4} parent=11 // pred_check
        %p241 = pneg %p145
      $region22: #{feature_propagation_forward.4} parent=11 // pred_check_branch
        %243 = sbr.rel (%p241) target = $region24
      $region23: #{feature_propagation_forward.4} parent=11 // pred_region
        _
      $region24: #{feature_propagation_forward.4} parent=11 // pred_fallthru
        _
      // Predicated region
      $region25: #{feature_propagation_forward.4} parent=11 // pred_check
        %p244 = pneg %p166
      $region26: #{feature_propagation_forward.4} parent=11 // pred_check_branch
        %246 = sbr.rel (%p244) target = $region28
      $region27: #{feature_propagation_forward.4} parent=11 // pred_region
        _
      $region28: #{feature_propagation_forward.4} parent=11 // pred_fallthru
        _
    $region12: #{feature_propagation_forward.4} parent=5 // pred_fallthru
      _
    %p247 = scmp.lt.s32.totalorder %s14, 2
    // Predicated region
    $region29: #{feature_propagation_forward.4} parent=5 // pred_check
      %p248 = pneg %p247
    $region30: #{feature_propagation_forward.4} parent=5 // pred_check_branch
      %250 = sbr.rel (%p248) target = $region32
    $region31: #{feature_propagation_forward.4} parent=5 // pred_region
      // Predicated region
      $region33: #{feature_propagation_forward.4} parent=31 // pred_check
        %p251 = pneg %p48
      $region34: #{feature_propagation_forward.4} parent=31 // pred_check_branch
        %253 = sbr.rel (%p251) target = $region36
      $region35: #{feature_propagation_forward.4} parent=31 // pred_region
        %p254 = scmp.lt.s32.totalorder %s21, 1
        %s255 = scalar_select %p254, %s21, 1
        %p256 = scmp.lt.s32.totalorder %s22, 0
        %s257 = scalar_select %p256, %s22, 0
        %s258 = sadd.s32 %s257, %s255
        %s259 = smul.addr %s258, 4
        %s260 = scalar_lea.vmem %s0, %s259
      $region36: #{feature_propagation_forward.4} parent=31 // pred_fallthru
        _
      // Predicated region
      $region37: #{feature_propagation_forward.4} parent=31 // pred_check
        %p261 = pneg %p76
      $region38: #{feature_propagation_forward.4} parent=31 // pred_check_branch
        %263 = sbr.rel (%p261) target = $region40
      $region39: #{feature_propagation_forward.4} parent=31 // pred_region
        %p264 = scmp.lt.s32.totalorder %s21, 1
        %s265 = scalar_select %p264, %s21, 1
        %p266 = scmp.lt.s32.totalorder %s22, 0
        %s267 = scalar_select %p266, %s22, 0
        %s268 = sadd.s32 %s267, %s265
        %s269 = smul.addr %s268, 4
        %s270 = scalar_lea.vmem %s1, %s269
      $region40: #{feature_propagation_forward.4} parent=31 // pred_fallthru
        _
    $region32: #{feature_propagation_forward.4} parent=5 // pred_fallthru
      _
    %p271 = scmp.le.s32.totalorder 1, %s14
    %p272 = scmp.lt.s32.totalorder %s14, 3
    %p273 = pnand %p271, %p272
    %p274 = pneg %p273
    // Predicated region
    $region41: #{feature_propagation_forward.4} parent=5 // pred_check
      _
    $region42: #{feature_propagation_forward.4} parent=5 // pred_check_branch
      %276 = sbr.rel (%p273) target = $region44
    $region43: #{feature_propagation_forward.4} parent=5 // pred_region
      %s277 = ssub.s32 %s14, 1
      %p278 = scmp.lt.s32.totalorder %s23, 1
      %s279 = scalar_select %p278, %s23, 1
      %p280 = scmp.lt.s32.totalorder %s24, 0
      %s281 = scalar_select %p280, %s24, 0
      %s282 = sadd.s32 %s281, %s279
      %s283 = smul.addr %s282, 4
      %s284 = scalar_lea.vmem %s0, %s283
      %p285 = pneg %p54
      %p286 = pneg %p51
      %p287 = scmp.lt.s32.totalorder %s23, 1
      %s288 = scalar_select %p287, %s23, 1
      %p289 = scmp.lt.s32.totalorder %s24, 0
      %s290 = scalar_select %p289, %s24, 0
      %s291 = sadd.s32 %s290, %s288
      %s292 = smul.addr %s291, 4
      %s293 = scalar_lea.vmem %s1, %s292
      %p294 = pneg %p82
      %p295 = pneg %p79
      %p296 = pneg %p103
      %p297 = pneg %p100
      %p298 = pneg %p124
      %p299 = pneg %p121
      %p300 = pneg %p145
      %p301 = pneg %p142
      %p302 = pneg %p166
      %p303 = pneg %p163
      %p304 = pneg %p194
      %p305 = pneg %p191
      %p306 = scmp.lt.s32.totalorder %s23, 1
      %s307 = scalar_select %p306, %s23, 1
      %p308 = scmp.lt.s32.totalorder %s24, 0
      %s309 = scalar_select %p308, %s24, 0
      %s310 = smul.addr %s307, 4
      %s311 = sadd.s32 %s309, %s310
      %s312 = smul.addr %s311, 4
      %s313 = scalar_lea.vmem %s6, %s312
      %p314 = pneg %p220
      %p315 = pneg %p217
      %p316 = scmp.lt.s32.totalorder %s23, 1
      %s317 = scalar_select %p316, %s23, 1
      %s318 = smul.addr %s317, 2
      %s319 = smul.addr %s318, 8
      %s320 = scalar_lea.vmem %s7, %s319
      %p321 = scmp.lt.s32.totalorder %s23, 1
      %s322 = scalar_select %p321, %s23, 1
      %p323 = scmp.lt.s32.totalorder %s24, 0
      %s324 = scalar_select %p323, %s24, 0
      %s325 = sadd.s32 %s324, %s322
      %s326 = smul.addr %s325, 4
      %s327 = scalar_lea.vmem %s0, %s326
      %p328 = scmp.lt.s32.totalorder %s23, 1
      %s329 = scalar_select %p328, %s23, 1
      %p330 = scmp.lt.s32.totalorder %s24, 0
      %s331 = scalar_select %p330, %s24, 0
      %s332 = sadd.s32 %s331, %s329
      %s333 = smul.addr %s332, 4
      %s334 = scalar_lea.vmem %s1, %s333
      %p335 = scmp.lt.s32.totalorder %s23, 1
      %s336 = scalar_select %p335, %s23, 1
      %p337 = scmp.lt.s32.totalorder %s24, 0
      %s338 = scalar_select %p337, %s24, 0
      %s339 = smul.addr %s336, 4
      %s340 = sadd.s32 %s338, %s339
      %s341 = smul.addr %s340, 4
      %s342 = scalar_lea.vmem %s6, %s341
      %p343 = scmp.lt.s32.totalorder %s23, 1
      %s344 = scalar_select %p343, %s23, 1
      %s345 = smul.addr %s344, 2
      %s346 = smul.addr %s345, 8
      %s347 = scalar_lea.vmem %s7, %s346
      %v349 = vld [vmem:[%s2] sm:$0xf]
      %v350 = vld [vmem:[%s2 + $0x4] sm:$0xf]
      %v351 = vld [vmem:[%s2 + $0x8] sm:$0xf]
      %v352 = vld [vmem:[%s2 + $0xc] sm:$0xf]
      %v353 = vld [vmem:[%s327] sm:$0x7]
      %v354 = vld [vmem:[%s3] sm:$0xf]
      %v355 = vld [vmem:[%s3 + $0x4] sm:$0xf]
      %v356 = vld [vmem:[%s3 + $0x8] sm:$0xf]
      %v357 = vld [vmem:[%s3 + $0xc] sm:$0xf]
      %v358 = vld [vmem:[%s334] sm:$0xf]
      %v363 = vunpack.c.l.b16 %v354
      %v364 = vunpack.c.l.b16 %v355
      %v365 = vunpack.c.l.b16 %v356
      %v366 = vunpack.c.l.b16 %v357
      %v367 = vpack.c.b16 %v364, %v363
      %v368 = vpack.c.b16 %v366, %v365
      %vm369 = vcmask 64512
      %v371 = vsel %vm369, %v367, 0
      %v374 = vsel %vm369, %v368, 0
      %vm376 = vcmask 1043456
      %v378 = vsel %vm376, %v358, 0
      %380 = vmatprep.subr.bf16.mxu0 0
      %381 = vmatpush1.bf16.msra.mxu0 0
      %382 = vmatprep.subr.bf16.mxu0 0
      %383 = vmatpush1.bf16.msra.mxu0 0
      %384 = vmatprep.subr.bf16.mxu0 0
      %385 = vmatpush1.bf16.msra.mxu0 0
      %386 = vmatprep.subr.bf16.mxu0 0
      %387 = vmatpush1.bf16.msra.mxu0 0
      %388 = vmatprep.subr.bf16.mxu0 0
      %389 = vmatpush1.bf16.msra.mxu0 0
      %390 = vmatprep.subr.bf16.mxu0 0
      %391 = vmatpush1.bf16.msra.mxu0 0
      %392 = vmatprep.subr.bf16.mxu0 0
      %393 = vmatpush1.bf16.msra.mxu0 0
      %394 = vmatprep.subr.bf16.mxu0 0
      %395 = vmatpush1.bf16.msra.mxu0 %v378
      %396 = vmatprep.subr.bf16.mxu0 0
      %397 = vmatpush2.bf16.msra.mxu0 0
      %398 = vmatprep.subr.bf16.mxu0 0
      %399 = vmatpush2.bf16.msra.mxu0 0
      %400 = vmatprep.subr.bf16.mxu0 0
      %401 = vmatpush2.bf16.msra.mxu0 0
      %402 = vmatprep.subr.bf16.mxu0 0
      %403 = vmatpush2.bf16.msra.mxu0 0
      %404 = vmatprep.subr.bf16.mxu0 0
      %405 = vmatpush2.bf16.msra.mxu0 0
      %406 = vmatprep.subr.bf16.mxu0 0
      %407 = vmatpush2.bf16.msra.mxu0 0
      %408 = vmatprep.subr.bf16.mxu0 0
      %409 = vmatpush2.bf16.msra.mxu0 0
      %410 = vmatprep.subr.bf16.mxu0 0
      %411 = vmatpush2.bf16.msra.mxu0 0
      %412 = vmatprep.mubr.bf16.mxu0 0
      %413 = vmatmul.mubr.bf16.gmra.mxu0 %v371
      %v414 = vpop.f32.mrf.mxu0
      %v415 = vadd.f32 0.0, %v414
      %v416 = vpop.f32.mrf.mxu0
      %v417 = vpop.f32.mrf.mxu0
      %v418 = vadd.f32 0.0, %v417
      %v419 = vpop.f32.mrf.mxu0
      %420 = vmatprep.mubr.bf16.mxu0 0
      %421 = vmatmul.mubr.bf16.gmra.mxu0 %v374
      %v422 = vpop.f32.mrf.mxu0
      %v423 = vadd.f32 0.0, %v422
      %v424 = vpop.f32.mrf.mxu0
      %v425 = vpop.f32.mrf.mxu0
      %v426 = vadd.f32 0.0, %v425
      %v427 = vpop.f32.mrf.mxu0
      %428 = vdwg.mxu0
      %v433 = vunpack.c.l.b16 %v349
      %v434 = vunpack.c.l.b16 %v350
      %v435 = vunpack.c.l.b16 %v351
      %v436 = vunpack.c.l.b16 %v352
      %v437 = vpack.c.b16 %v434, %v433
      %v438 = vpack.c.b16 %v436, %v435
      %vm439 = vcmask 48128
      %v441 = vsel %vm439, %v437, 0
      %v444 = vsel %vm439, %v438, 0
      %vm446 = vcmask 1042432
      %v448 = vsel %vm446, %v353, 0
      %450 = vmatprep.subr.bf16.mxu0 0
      %451 = vmatpush1.bf16.msra.mxu0 0
      %452 = vmatprep.subr.bf16.mxu0 0
      %453 = vmatpush1.bf16.msra.mxu0 0
      %454 = vmatprep.subr.bf16.mxu0 0
      %455 = vmatpush1.bf16.msra.mxu0 0
      %456 = vmatprep.subr.bf16.mxu0 0
      %457 = vmatpush1.bf16.msra.mxu0 0
      %458 = vmatprep.subr.bf16.mxu0 0
      %459 = vmatpush1.bf16.msra.mxu0 0
      %460 = vmatprep.subr.bf16.mxu0 0
      %461 = vmatpush1.bf16.msra.mxu0 0
      %462 = vmatprep.subr.bf16.mxu0 0
      %463 = vmatpush1.bf16.msra.mxu0 0
      %464 = vmatprep.subr.bf16.mxu0 0
      %465 = vmatpush1.bf16.msra.mxu0 %v448
      %466 = vmatprep.subr.bf16.mxu0 0
      %467 = vmatpush2.bf16.msra.mxu0 0
      %468 = vmatprep.subr.bf16.mxu0 0
      %469 = vmatpush2.bf16.msra.mxu0 0
      %470 = vmatprep.subr.bf16.mxu0 0
      %471 = vmatpush2.bf16.msra.mxu0 0
      %472 = vmatprep.subr.bf16.mxu0 0
      %473 = vmatpush2.bf16.msra.mxu0 0
      %474 = vmatprep.subr.bf16.mxu0 0
      %475 = vmatpush2.bf16.msra.mxu0 0
      %476 = vmatprep.subr.bf16.mxu0 0
      %477 = vmatpush2.bf16.msra.mxu0 0
      %478 = vmatprep.subr.bf16.mxu0 0
      %479 = vmatpush2.bf16.msra.mxu0 0
      %480 = vmatprep.subr.bf16.mxu0 0
      %481 = vmatpush2.bf16.msra.mxu0 0
      %482 = vmatprep.mubr.bf16.mxu0 0
      %483 = vmatmul.mubr.bf16.gmra.mxu0 %v441
      %v484 = vpop.f32.mrf.mxu0
      %v485 = vadd.f32 %v415, %v484
      %v486 = vpop.f32.mrf.mxu0
      %v487 = vpop.f32.mrf.mxu0
      %v488 = vadd.f32 %v418, %v487
      %v489 = vpop.f32.mrf.mxu0
      %490 = vmatprep.mubr.bf16.mxu0 0
      %491 = vmatmul.mubr.bf16.gmra.mxu0 %v444
      %v492 = vpop.f32.mrf.mxu0
      %v493 = vadd.f32 %v423, %v492
      %v494 = vpop.f32.mrf.mxu0
      %v495 = vpop.f32.mrf.mxu0
      %v496 = vadd.f32 %v426, %v495
      %v497 = vpop.f32.mrf.mxu0
      %498 = vdwg.mxu0
      %v499 = vld [vmem:[%s4] sm:$0xff]
      %v500 = vld [vmem:[%s4 + $0x8] sm:$0xff]
      %v501 = vld [vmem:[%s4 + $0x10] sm:$0xff]
      %v502 = vld [vmem:[%s4 + $0x18] sm:$0xff]
      %504 = vset.pattern.permute.xlu0 0
      %505 = vperm.xlu0 %504, %v499
      %v506 = vpop.permute.xlu0 %505
      %509 = vset.pattern.permute.xlu0 0
      %510 = vperm.xlu0 %509, %v500
      %v511 = vpop.permute.xlu0 %510
      %514 = vset.pattern.permute.xlu0 0
      %515 = vperm.xlu0 %514, %v501
      %v516 = vpop.permute.xlu0 %515
      %519 = vset.pattern.permute.xlu0 0
      %520 = vperm.xlu0 %519, %v502
      %v521 = vpop.permute.xlu0 %520
      %v523 = vmul.f32 %v485, %v506
      %v524 = vmul.f32 %v488, %v511
      %v525 = vmul.f32 %v493, %v516
      %v526 = vmul.f32 %v496, %v521
      %527 = vset.pattern.permute.xlu0 1
      %528 = vperm.xlu0 %527, %v499
      %v529 = vpop.permute.xlu0 %528
      %531 = vset.pattern.permute.xlu0 1
      %532 = vperm.xlu0 %531, %v500
      %v533 = vpop.permute.xlu0 %532
      %535 = vset.pattern.permute.xlu0 1
      %536 = vperm.xlu0 %535, %v501
      %v537 = vpop.permute.xlu0 %536
      %539 = vset.pattern.permute.xlu0 1
      %540 = vperm.xlu0 %539, %v502
      %v541 = vpop.permute.xlu0 %540
      %v543 = vadd.f32 %v523, %v529
      %v544 = vadd.f32 %v524, %v533
      %v545 = vadd.f32 %v525, %v537
      %v546 = vadd.f32 %v526, %v541
      %v547 = vmax.f32 %v543, 0.0
      %v548 = vmax.f32 %v544, 0.0
      %v549 = vmax.f32 %v545, 0.0
      %v550 = vmax.f32 %v546, 0.0
      %v551 = vpack.c.bf16 %v548, %v547
      %v552 = vpack.c.bf16 %v550, %v549
      %v555 = vunpack.c.l.b16 %v551
      %v556 = vunpack.c.h.b16 %v551
      %v557 = vunpack.c.l.b16 %v552
      %v558 = vunpack.c.h.b16 %v552
      %v559 = vpack.c.b16 %v555, %v555
      %v560 = vpack.c.b16 %v556, %v556
      %v561 = vpack.c.b16 %v557, %v557
      %v562 = vpack.c.b16 %v558, %v558
      %567 = vst [vmem:[%s342] sm:$0xf] %v559
      %568 = vst [vmem:[%s342 + $0x4] sm:$0xf] %v560
      %569 = vst [vmem:[%s342 + $0x8] sm:$0xf] %v561
      %570 = vst [vmem:[%s342 + $0xc] sm:$0xf] %v562
      %v571 = vld [vmem:[%s5] sm:$0xf]
      %v572 = vld [vmem:[%s5 + $0x4] sm:$0xf]
      %v575 = vunpack.c.l.b16 %v571
      %v576 = vunpack.c.l.b16 %v572
      %v577 = vpack.c.b16 %v576, %v575
      %vm578 = vcmask 261120
      %v580 = vsel %vm578, %v577, 0
      %582 = vmatprep.subr.bf16.mxu0 0
      %583 = vmatpush1.bf16.msra.mxu0 0
      %584 = vmatprep.subr.bf16.mxu0 0
      %585 = vmatpush1.bf16.msra.mxu0 0
      %586 = vmatprep.subr.bf16.mxu0 0
      %587 = vmatpush1.bf16.msra.mxu0 0
      %588 = vmatprep.subr.bf16.mxu0 0
      %589 = vmatpush1.bf16.msra.mxu0 0
      %590 = vmatprep.subr.bf16.mxu0 0
      %591 = vmatpush1.bf16.msra.mxu0 0
      %592 = vmatprep.subr.bf16.mxu0 0
      %593 = vmatpush1.bf16.msra.mxu0 0
      %594 = vmatprep.subr.bf16.mxu0 0
      %595 = vmatpush1.bf16.msra.mxu0 %v552
      %596 = vmatprep.subr.bf16.mxu0 0
      %597 = vmatpush1.bf16.msra.mxu0 %v551
      %598 = vmatprep.subr.bf16.mxu0 0
      %599 = vmatpush2.bf16.msra.mxu0 0
      %600 = vmatprep.subr.bf16.mxu0 0
      %601 = vmatpush2.bf16.msra.mxu0 0
      %602 = vmatprep.subr.bf16.mxu0 0
      %603 = vmatpush2.bf16.msra.mxu0 0
      %604 = vmatprep.subr.bf16.mxu0 0
      %605 = vmatpush2.bf16.msra.mxu0 0
      %606 = vmatprep.subr.bf16.mxu0 0
      %607 = vmatpush2.bf16.msra.mxu0 0
      %608 = vmatprep.subr.bf16.mxu0 0
      %609 = vmatpush2.bf16.msra.mxu0 0
      %610 = vmatprep.subr.bf16.mxu0 0
      %611 = vmatpush2.bf16.msra.mxu0 0
      %612 = vmatprep.subr.bf16.mxu0 0
      %613 = vmatpush2.bf16.msra.mxu0 0
      %614 = vmatprep.mubr.bf16.mxu0 0
      %615 = vmatmul.mubr.bf16.gmra.mxu0 %v580
      %v616 = vpop.f32.mrf.mxu0
      %v617 = vadd.f32 0.0, %v616
      %v618 = vpop.f32.mrf.mxu0
      %v619 = vpop.f32.mrf.mxu0
      %v620 = vadd.f32 0.0, %v619
      %v621 = vpop.f32.mrf.mxu0
      %622 = vdwg.mxu0
      %s623 = smul.u32 %s24, 128
      %v624 = vlaneseq
      %v625 = vand.u32 %v624, 127
      %v626 = vstv %s623
      %v627 = vadd.s32 %v626, %v625
      %vm628 = vcmp.lt.s32.totalorder %v627, 16
      %v629 = vsel %vm628, 1, 0
      %v630 = vcvt.s32.f32 %v629
      %v631 = vmul.f32 %v617, %v630
      %v632 = vmul.f32 %v620, %v630
      %633 = vadd.xlane.f32.xlu0 %v631
      %v634 = vpop.xlane.xlu0 %633
      %635 = vadd.xlane.f32.xlu0 %v632
      %v636 = vpop.xlane.xlu0 %635
      %v637 = vmul.f32 %v631, %v631
      %v638 = vmul.f32 %v632, %v632
      %639 = vadd.xlane.f32.xlu0 %v637
      %v640 = vpop.xlane.xlu0 %639
      %641 = vadd.xlane.f32.xlu0 %v638
      %v642 = vpop.xlane.xlu0 %641
      %vm643 = vcmask 7168
      %v644 = vsel %vm643, %v634, %v640
      %v645 = vsel %vm643, %v636, %v642
      %p646 = scmp.eq.s32.totalorder %s24, 0
      // Predicated region
      $region45: #{feature_propagation_forward.4} parent=43 // pred_check
        %p647 = pneg %p646
      $region46: #{feature_propagation_forward.4} parent=43 // pred_check_branch
        %649 = sbr.rel (%p647) target = $region48
      $region47: #{feature_propagation_forward.4} parent=43 // pred_region
        %vm650 = vcmask 15360
        %651 = vst.msk [vmem:[%s347] sm:$0xff] %vm650, 0.0
        %652 = vst.msk [vmem:[%s347 + $0x8] sm:$0xff] %vm650, 0.0
      $region48: #{feature_propagation_forward.4} parent=43 // pred_fallthru
        _
      %v653 = vld [vmem:[%s347] sm:$0xff]
      %v654 = vld [vmem:[%s347 + $0x8] sm:$0xff]
      %v655 = vadd.f32 %v653, %v644
      %v656 = vadd.f32 %v654, %v645
      %vm657 = vcmask 15360
      %658 = vst.msk [vmem:[%s347] sm:$0xff] %vm657, %v655
      %659 = vst.msk [vmem:[%s347 + $0x8] sm:$0xff] %vm657, %v656
      %p660 = scmp.lt.s32.totalorder %s23, 1
      %s661 = scalar_select %p660, %s23, 1
      %p662 = scmp.lt.s32.totalorder %s24, 0
      %s663 = scalar_select %p662, %s24, 0
      %s664 = smul.addr %s661, 4
      %s665 = sadd.s32 %s663, %s664
      %s666 = smul.addr %s665, 4
      %s667 = scalar_lea.vmem %s6, %s666
      %p668 = scmp.lt.s32.totalorder %s23, 1
      %s669 = scalar_select %p668, %s23, 1
      %s670 = smul.addr %s669, 2
      %s671 = smul.addr %s670, 8
      %s672 = scalar_lea.vmem %s7, %s671
      // Predicated region
      $region49: #{feature_propagation_forward.4} parent=43 // pred_check
        %p673 = pneg %p191
      $region50: #{feature_propagation_forward.4} parent=43 // pred_check_branch
        %675 = sbr.rel (%p673) target = $region52
      $region51: #{feature_propagation_forward.4} parent=43 // pred_region
        _
      $region52: #{feature_propagation_forward.4} parent=43 // pred_fallthru
        _
      // Predicated region
      $region53: #{feature_propagation_forward.4} parent=43 // pred_check
        %p676 = pneg %p217
      $region54: #{feature_propagation_forward.4} parent=43 // pred_check_branch
        %678 = sbr.rel (%p676) target = $region56
      $region55: #{feature_propagation_forward.4} parent=43 // pred_region
        _
      $region56: #{feature_propagation_forward.4} parent=43 // pred_fallthru
        _
    $region44: #{feature_propagation_forward.4} parent=5 // pred_fallthru
      _
    %p679 = scmp.le.s32.totalorder 2, %s14
    // Predicated region
    $region57: #{feature_propagation_forward.4} parent=5 // pred_check
      %p680 = pneg %p679
    $region58: #{feature_propagation_forward.4} parent=5 // pred_check_branch
      %682 = sbr.rel (%p680) target = $region60
    $region59: #{feature_propagation_forward.4} parent=5 // pred_region
      %s683 = ssub.s32 %s14, 2
      // Predicated region
      $region61: #{feature_propagation_forward.4} parent=59 // pred_check
        %p684 = pneg %p197
      $region62: #{feature_propagation_forward.4} parent=59 // pred_check_branch
        %686 = sbr.rel (%p684) target = $region64
      $region63: #{feature_propagation_forward.4} parent=59 // pred_region
        %p687 = scmp.lt.s32.totalorder %s25, 1
        %s688 = scalar_select %p687, %s25, 1
        %p689 = scmp.lt.s32.totalorder %s26, 0
        %s690 = scalar_select %p689, %s26, 0
        %s691 = smul.addr %s688, 4
        %s692 = sadd.s32 %s690, %s691
        %s693 = smul.addr %s692, 4
        %s694 = scalar_lea.vmem %s6, %s693
      $region64: #{feature_propagation_forward.4} parent=59 // pred_fallthru
        _
      // Predicated region
      $region65: #{feature_propagation_forward.4} parent=59 // pred_check
        %p695 = pneg %p223
      $region66: #{feature_propagation_forward.4} parent=59 // pred_check_branch
        %697 = sbr.rel (%p695) target = $region68
      $region67: #{feature_propagation_forward.4} parent=59 // pred_region
        %p698 = scmp.lt.s32.totalorder %s25, 1
        %s699 = scalar_select %p698, %s25, 1
        %s700 = smul.addr %s699, 2
        %s701 = smul.addr %s700, 8
        %s702 = scalar_lea.vmem %s7, %s701
      $region68: #{feature_propagation_forward.4} parent=59 // pred_fallthru
        _
    $region60: #{feature_propagation_forward.4} parent=5 // pred_fallthru
      _
  $region6: #{feature_propagation_forward.4} parent=0 // loop_footer
    %s18 = sadd.s32 1, %s14
  $region7: #{feature_propagation_forward.4} parent=0 // loop_footer_branch
    %13 = sbr.rel target = $region3
  $region8: #{feature_propagation_forward.4} parent=0 // loop_exit
    _

// kernel: feature_propagation_forward.3
$region0: #{feature_propagation_forward.3}
  #allocation0 [shape = 'u32[]', space=smem, size = 0x4, offset = 0x4, fixed_abs, tag = 'smem constant byte address 0x4 - core index']
  #allocation1 [shape = 'u32[144,128]{1,0:T(1,128)}', space=vmem, size = 0x12000, scoped, tag = 'internal scratch']
  %s0 = inlined_call_operand.vmem [shape: f32[2,3,128], index: 0, kind: input, shape index: {}]
  %s1 = inlined_call_operand.vmem [shape: f32[2,8,3], index: 1, kind: input, shape index: {}]
  %s2 = inlined_call_operand.vmem [shape: bf16[2,8,8], index: 2, kind: input, shape index: {}]
  %s3 = inlined_call_operand.vmem [shape: bf16[2,6,128], index: 3, kind: input, shape index: {}]
  %s4 = inlined_call_operand.vmem [shape: bf16[32,6], index: 4, kind: input, shape index: {}]
  %s5 = inlined_call_operand.vmem [shape: bf16[32,8], index: 5, kind: input, shape index: {}]
  %s6 = inlined_call_operand.vmem [shape: bf16[2,8,128], index: 6, kind: output, shape index: {0}]
  %s7 = inlined_call_operand.vmem [shape: f32[2,32,2], index: 7, kind: output, shape index: {1}]
  %8 = xla_tuple %s6, %s7
  %s9 = sld [smem:[#allocation0]]
  $region69: #{feature_propagation_forward.3} parent=0
    _
  %s11 = ssub.s32 1, %s9
  %s12 = scalar_select 0, %s11, %s9
  loop: start=0, step=1, limit=4
  $region2: #{feature_propagation_forward.3} parent=0 // loop_pre_header
    _
  $region3: #{feature_propagation_forward.3} parent=0 // loop_header
    %s14 = sphi 0, %s18
    %p15 = scmp.ge.s32.totalorder %s14, 4
    %s21 = sphi 0, %s33
    %s22 = sphi 0, %s29
    %s23 = sphi 0, %s21
    %s24 = sphi 0, %s22
    %s25 = sphi 0, %s23
    %s26 = sphi 0, %s24
    %s38 = sphi 0, %s40
    %s41 = sphi 0, %s38
    %s42 = sphi 0, %s41
    %s58 = sphi 0, %s42
    %s64 = sphi 0, %s66
    %s67 = sphi 0, %s64
    %s68 = sphi 0, %s67
    %s84 = sphi 0, %s68
    %s90 = sphi 0, %s92
    %s93 = sphi 0, %s90
    %s94 = sphi 0, %s93
    %s110 = sphi 0, %s94
    %s118 = sphi 0, %s120
    %s121 = sphi 0, %s118
    %s122 = sphi 0, %s121
    %s138 = sphi 0, %s122
    %s142 = sphi 0, %s142
    %s144 = sphi 0, %s142
    %s145 = sphi 0, %s144
    %s159 = sphi 0, %s145
    %s163 = sphi 0, %s163
    %s165 = sphi 0, %s163
    %s166 = sphi 0, %s165
    %s180 = sphi 0, %s166
    %s188 = sphi 0, %s190
    %s191 = sphi 0, %s188
    %s192 = sphi 0, %s191
    %s208 = sphi 0, %s192
    %s214 = sphi 0, %s216
    %s217 = sphi 0, %s214
    %s218 = sphi 0, %s217
    %s234 = sphi 0, %s218
  $region4: #{feature_propagation_forward.3} parent=0 // loop_header_branch
    %17 = sbr.rel (%p15) target = $region8
  $region5: #{feature_propagation_forward.3} parent=0 // loop_body
    %s19 = ssub.s32 %s14, 1
    %s20 = ssub.s32 %s14, 2
    %s27 = sadd.s32 1, %s22
    %p28 = scmp.ge.s32.totalorder %s27, 1
    %s29 = scalar_select %p28, 0, %s27
    %s30 = sadd.s32 1, %s21
    %s31 = scalar_select %p28, %s30, %s21
    %p32 = scmp.ge.s32.totalorder %s31, 2
    %s33 = scalar_select %p32, 0, %s31
    %s34 = ssub.s32 %s21, %s33
    %s35 = ssub.s32 %s22, %s29
    %s36 = sor.u32 %s34, %s35
    %p37 = scmp.eq.s32.totalorder %s36, 0
    %s39 = sadd.s32 %s38, 1
    %s40 = scalar_select %p37, %s38, %s39
    %p43 = pneg %p37
    %p44 = scmp.eq.s32.totalorder %s14, 1
    %p45 = por %p43, %p44
    %p46 = scmp.ne.s32.totalorder %s38, %s41
    %p47 = scmp.eq.s32.totalorder %s14, 0
    %p48 = por %p46, %p47
    %p49 = scmp.ne.s32.totalorder %s38, %s41
    %p50 = scmp.eq.s32.totalorder %s19, 1
    %p51 = por %p49, %p50
    %p52 = scmp.ne.s32.totalorder %s41, %s42
    %p53 = scmp.eq.s32.totalorder %s19, 0
    %p54 = por %p52, %p53
    %p55 = scmp.ne.s32.totalorder %s41, %s42
    %p56 = scmp.eq.s32.totalorder %s20, 1
    %p57 = por %p55, %p56
    %p59 = scmp.ne.s32.totalorder %s42, %s58
    %p60 = scmp.eq.s32.totalorder %s20, 0
    %p61 = por %p59, %p60
    %s62 = ssub.s32 %s21, %s33
    %p63 = scmp.eq.s32.totalorder %s62, 0
    %s65 = sadd.s32 %s64, 1
    %s66 = scalar_select %p63, %s64, %s65
    %p69 = pneg %p63
    %p70 = scmp.eq.s32.totalorder %s14, 1
    %p71 = por %p69, %p70
    %p72 = scmp.ne.s32.totalorder %s64, %s67
    %p73 = scmp.eq.s32.totalorder %s14, 0
    %p74 = por %p72, %p73
    %p75 = scmp.ne.s32.totalorder %s64, %s67
    %p76 = scmp.eq.s32.totalorder %s19, 1
    %p77 = por %p75, %p76
    %p78 = scmp.ne.s32.totalorder %s67, %s68
    %p79 = scmp.eq.s32.totalorder %s19, 0
    %p80 = por %p78, %p79
    %p81 = scmp.ne.s32.totalorder %s67, %s68
    %p82 = scmp.eq.s32.totalorder %s20, 1
    %p83 = por %p81, %p82
    %p85 = scmp.ne.s32.totalorder %s68, %s84
    %p86 = scmp.eq.s32.totalorder %s20, 0
    %p87 = por %p85, %p86
    %s88 = ssub.s32 %s21, %s33
    %p89 = scmp.eq.s32.totalorder %s88, 0
    %s91 = sadd.s32 %s90, 1
    %s92 = scalar_select %p89, %s90, %s91
    %p95 = pneg %p89
    %p96 = scmp.eq.s32.totalorder %s14, 1
    %p97 = por %p95, %p96
    %p98 = scmp.ne.s32.totalorder %s90, %s93
    %p99 = scmp.eq.s32.totalorder %s14, 0
    %p100 = por %p98, %p99
    %p101 = scmp.ne.s32.totalorder %s90, %s93
    %p102 = scmp.eq.s32.totalorder %s19, 1
    %p103 = por %p101, %p102
    %p104 = scmp.ne.s32.totalorder %s93, %s94
    %p105 = scmp.eq.s32.totalorder %s19, 0
    %p106 = por %p104, %p105
    %p107 = scmp.ne.s32.totalorder %s93, %s94
    %p108 = scmp.eq.s32.totalorder %s20, 1
    %p109 = por %p107, %p108
    %p111 = scmp.ne.s32.totalorder %s94, %s110
    %p112 = scmp.eq.s32.totalorder %s20, 0
    %p113 = por %p111, %p112
    %s114 = ssub.s32 %s21, %s33
    %s115 = ssub.s32 %s22, %s29
    %s116 = sor.u32 %s114, %s115
    %p117 = scmp.eq.s32.totalorder %s116, 0
    %s119 = sadd.s32 %s118, 1
    %s120 = scalar_select %p117, %s118, %s119
    %p123 = pneg %p117
    %p124 = scmp.eq.s32.totalorder %s14, 1
    %p125 = por %p123, %p124
    %p126 = scmp.ne.s32.totalorder %s118, %s121
    %p127 = scmp.eq.s32.totalorder %s14, 0
    %p128 = por %p126, %p127
    %p129 = scmp.ne.s32.totalorder %s118, %s121
    %p130 = scmp.eq.s32.totalorder %s19, 1
    %p131 = por %p129, %p130
    %p132 = scmp.ne.s32.totalorder %s121, %s122
    %p133 = scmp.eq.s32.totalorder %s19, 0
    %p134 = por %p132, %p133
    %p135 = scmp.ne.s32.totalorder %s121, %s122
    %p136 = scmp.eq.s32.totalorder %s20, 1
    %p137 = por %p135, %p136
    %p139 = scmp.ne.s32.totalorder %s122, %s138
    %p140 = scmp.eq.s32.totalorder %s20, 0
    %p141 = por %p139, %p140
    %s143 = sadd.s32 %s142, 1
    %p146 = scmp.eq.s32.totalorder %s14, 1
    %p147 = scmp.ne.s32.totalorder %s142, %s144
    %p148 = scmp.eq.s32.totalorder %s14, 0
    %p149 = por %p147, %p148
    %p150 = scmp.ne.s32.totalorder %s142, %s144
    %p151 = scmp.eq.s32.totalorder %s19, 1
    %p152 = por %p150, %p151
    %p153 = scmp.ne.s32.totalorder %s144, %s145
    %p154 = scmp.eq.s32.totalorder %s19, 0
    %p155 = por %p153, %p154
    %p156 = scmp.ne.s32.totalorder %s144, %s145
    %p157 = scmp.eq.s32.totalorder %s20, 1
    %p158 = por %p156, %p157
    %p160 = scmp.ne.s32.totalorder %s145, %s159
    %p161 = scmp.eq.s32.totalorder %s20, 0
    %p162 = por %p160, %p161
    %s164 = sadd.s32 %s163, 1
    %p167 = scmp.eq.s32.totalorder %s14, 1
    %p168 = scmp.ne.s32.totalorder %s163, %s165
    %p169 = scmp.eq.s32.totalorder %s14, 0
    %p170 = por %p168, %p169
    %p171 = scmp.ne.s32.totalorder %s163, %s165
    %p172 = scmp.eq.s32.totalorder %s19, 1
    %p173 = por %p171, %p172
    %p174 = scmp.ne.s32.totalorder %s165, %s166
    %p175 = scmp.eq.s32.totalorder %s19, 0
    %p176 = por %p174, %p175
    %p177 = scmp.ne.s32.totalorder %s165, %s166
    %p178 = scmp.eq.s32.totalorder %s20, 1
    %p179 = por %p177, %p178
    %p181 = scmp.ne.s32.totalorder %s166, %s180
    %p182 = scmp.eq.s32.totalorder %s20, 0
    %p183 = por %p181, %p182
    %s184 = ssub.s32 %s21, %s33
    %s185 = ssub.s32 %s22, %s29
    %s186 = sor.u32 %s184, %s185
    %p187 = scmp.eq.s32.totalorder %s186, 0
    %s189 = sadd.s32 %s188, 1
    %s190 = scalar_select %p187, %s188, %s189
    %p193 = pneg %p187
    %p194 = scmp.eq.s32.totalorder %s14, 1
    %p195 = por %p193, %p194
    %p196 = scmp.ne.s32.totalorder %s188, %s191
    %p197 = scmp.eq.s32.totalorder %s14, 0
    %p198 = por %p196, %p197
    %p199 = scmp.ne.s32.totalorder %s188, %s191
    %p200 = scmp.eq.s32.totalorder %s19, 1
    %p201 = por %p199, %p200
    %p202 = scmp.ne.s32.totalorder %s191, %s192
    %p203 = scmp.eq.s32.totalorder %s19, 0
    %p204 = por %p202, %p203
    %p205 = scmp.ne.s32.totalorder %s191, %s192
    %p206 = scmp.eq.s32.totalorder %s20, 1
    %p207 = por %p205, %p206
    %p209 = scmp.ne.s32.totalorder %s192, %s208
    %p210 = scmp.eq.s32.totalorder %s20, 0
    %p211 = por %p209, %p210
    %s212 = ssub.s32 %s21, %s33
    %p213 = scmp.eq.s32.totalorder %s212, 0
    %s215 = sadd.s32 %s214, 1
    %s216 = scalar_select %p213, %s214, %s215
    %p219 = pneg %p213
    %p220 = scmp.eq.s32.totalorder %s14, 1
    %p221 = por %p219, %p220
    %p222 = scmp.ne.s32.totalorder %s214, %s217
    %p223 = scmp.eq.s32.totalorder %s14, 0
    %p224 = por %p222, %p223
    %p225 = scmp.ne.s32.totalorder %s214, %s217
    %p226 = scmp.eq.s32.totalorder %s19, 1
    %p227 = por %p225, %p226
    %p228 = scmp.ne.s32.totalorder %s217, %s218
    %p229 = scmp.eq.s32.totalorder %s19, 0
    %p230 = por %p228, %p229
    %p231 = scmp.ne.s32.totalorder %s217, %s218
    %p232 = scmp.eq.s32.totalorder %s20, 1
    %p233 = por %p231, %p232
    %p235 = scmp.ne.s32.totalorder %s218, %s234
    %p236 = scmp.eq.s32.totalorder %s20, 0
    %p237 = por %p235, %p236
    %p238 = scmp.le.s32.totalorder 1, %s14
    %p239 = scmp.lt.s32.totalorder %s14, 3
    %p240 = pnand %p238, %p239
    %p241 = pneg %p240
    // Predicated region
    $region9: #{feature_propagation_forward.3} parent=5 // pred_check
      _
    $region10: #{feature_propagation_forward.3} parent=5 // pred_check_branch
      %243 = sbr.rel (%p240) target = $region12
    $region11: #{feature_propagation_forward.3} parent=5 // pred_region
      %s244 = ssub.s32 %s14, 1
      // Predicated region
      $region13: #{feature_propagation_forward.3} parent=11 // pred_check
        %p245 = pneg %p155
      $region14: #{feature_propagation_forward.3} parent=11 // pred_check_branch
        %247 = sbr.rel (%p245) target = $region16
      $region15: #{feature_propagation_forward.3} parent=11 // pred_region
        _
      $region16: #{feature_propagation_forward.3} parent=11 // pred_fallthru
        _
      // Predicated region
      $region17: #{feature_propagation_forward.3} parent=11 // pred_check
        %p248 = pneg %p176
      $region18: #{feature_propagation_forward.3} parent=11 // pred_check_branch
        %250 = sbr.rel (%p248) target = $region20
      $region19: #{feature_propagation_forward.3} parent=11 // pred_region
        _
      $region20: #{feature_propagation_forward.3} parent=11 // pred_fallthru
        _
    $region12: #{feature_propagation_forward.3} parent=5 // pred_fallthru
      _
    %p251 = scmp.lt.s32.totalorder %s14, 2
    // Predicated region
    $region21: #{feature_propagation_forward.3} parent=5 // pred_check
      %p252 = pneg %p251
    $region22: #{feature_propagation_forward.3} parent=5 // pred_check_branch
      %254 = sbr.rel (%p252) target = $region24
    $region23: #{feature_propagation_forward.3} parent=5 // pred_region
      // Predicated region
      $region25: #{feature_propagation_forward.3} parent=23 // pred_check
        %p255 = pneg %p48
      $region26: #{feature_propagation_forward.3} parent=23 // pred_check_branch
        %257 = sbr.rel (%p255) target = $region28
      $region27: #{feature_propagation_forward.3} parent=23 // pred_region
        %p258 = scmp.lt.s32.totalorder %s21, 1
        %s259 = scalar_select %p258, %s21, 1
        %p260 = scmp.lt.s32.totalorder %s22, 0
        %s261 = scalar_select %p260, %s22, 0
        %s262 = sadd.s32 %s261, %s259
        %s263 = smul.addr %s262, 4
        %s264 = scalar_lea.vmem %s0, %s263
      $region28: #{feature_propagation_forward.3} parent=23 // pred_fallthru
        _
      // Predicated region
      $region29: #{feature_propagation_forward.3} parent=23 // pred_check
        %p265 = pneg %p74
      $region30: #{feature_propagation_forward.3} parent=23 // pred_check_branch
        %267 = sbr.rel (%p265) target = $region32
      $region31: #{feature_propagation_forward.3} parent=23 // pred_region
        %p268 = scmp.lt.s32.totalorder %s21, 1
        %s269 = scalar_select %p268, %s21, 1
        %s270 = smul.addr %s269, 8
        %s271 = scalar_lea.vmem %s1, %s270
      $region32: #{feature_propagation_forward.3} parent=23 // pred_fallthru
        _
      // Predicated region
      $region33: #{feature_propagation_forward.3} parent=23 // pred_check
        %p272 = pneg %p100
      $region34: #{feature_propagation_forward.3} parent=23 // pred_check_branch
        %274 = sbr.rel (%p272) target = $region36
      $region35: #{feature_propagation_forward.3} parent=23 // pred_region
        %p275 = scmp.lt.s32.totalorder %s21, 1
        %s276 = scalar_select %p275, %s21, 1
        %s277 = smul.addr %s276, 4
        %s278 = scalar_lea.vmem %s2, %s277
      $region36: #{feature_propagation_forward.3} parent=23 // pred_fallthru
        _
      // Predicated region
      $region37: #{feature_propagation_forward.3} parent=23 // pred_check
        %p279 = pneg %p128
      $region38: #{feature_propagation_forward.3} parent=23 // pred_check_branch
        %281 = sbr.rel (%p279) target = $region40
      $region39: #{feature_propagation_forward.3} parent=23 // pred_region
        %p282 = scmp.lt.s32.totalorder %s21, 1
        %s283 = scalar_select %p282, %s21, 1
        %p284 = scmp.lt.s32.totalorder %s22, 0
        %s285 = scalar_select %p284, %s22, 0
        %s286 = sadd.s32 %s285, %s283
        %s287 = smul.addr %s286, 4
        %s288 = scalar_lea.vmem %s3, %s287
      $region40: #{feature_propagation_forward.3} parent=23 // pred_fallthru
        _
    $region24: #{feature_propagation_forward.3} parent=5 // pred_fallthru
      _
    %p289 = scmp.le.s32.totalorder 1, %s14
    %p290 = scmp.lt.s32.totalorder %s14, 3
    %p291 = pnand %p289, %p290
    %p292 = pneg %p291
    // Predicated region
    $region41: #{feature_propagation_forward.3} parent=5 // pred_check
      _
    $region42: #{feature_propagation_forward.3} parent=5 // pred_check_branch
      %294 = sbr.rel (%p291) target = $region44
    $region43: #{feature_propagation_forward.3} parent=5 // pred_region
      %s295 = ssub.s32 %s14, 1
      %p296 = scmp.lt.s32.totalorder %s23, 1
      %s297 = scalar_select %p296, %s23, 1
      %p298 = scmp.lt.s32.totalorder %s24, 0
      %s299 = scalar_select %p298, %s24, 0
      %s300 = sadd.s32 %s299, %s297
      %s301 = smul.addr %s300, 4
      %s302 = scalar_lea.vmem %s0, %s301
      %p303 = pneg %p54
      %p304 = pneg %p51
      %p305 = scmp.lt.s32.totalorder %s23, 1
      %s306 = scalar_select %p305, %s23, 1
      %s307 = smul.addr %s306, 8
      %s308 = scalar_lea.vmem %s1, %s307
      %p309 = pneg %p80
      %p310 = pneg %p77
      %p311 = scmp.lt.s32.totalorder %s23, 1
      %s312 = scalar_select %p311, %s23, 1
      %s313 = smul.addr %s312, 4
      %s314 = scalar_lea.vmem %s2, %s313
      %p315 = pneg %p106
      %p316 = pneg %p103
      %p317 = scmp.lt.s32.totalorder %s23, 1
      %s318 = scalar_select %p317, %s23, 1
      %p319 = scmp.lt.s32.totalorder %s24, 0
      %s320 = scalar_select %p319, %s24, 0
      %s321 = sadd.s32 %s320, %s318
      %s322 = smul.addr %s321, 4
      %s323 = scalar_lea.vmem %s3, %s322
      %p324 = pneg %p134
      %p325 = pneg %p131
      %p326 = pneg %p155
      %p327 = pneg %p152
      %p328 = pneg %p176
      %p329 = pneg %p173
      %p330 = pneg %p204
      %p331 = pneg %p201
      %p332 = scmp.lt.s32.totalorder %s23, 1
      %s333 = scalar_select %p332, %s23, 1
      %p334 = scmp.lt.s32.totalorder %s24, 0
      %s335 = scalar_select %p334, %s24, 0
      %s336 = sadd.s32 %s335, %s333
      %s337 = smul.addr %s336, 4
      %s338 = scalar_lea.vmem %s6, %s337
      %p339 = pneg %p230
      %p340 = pneg %p227
      %p341 = scmp.lt.s32.totalorder %s23, 1
      %s342 = scalar_select %p341, %s23, 1
      %s343 = smul.addr %s342, 4
      %s344 = smul.addr %s343, 8
      %s345 = scalar_lea.vmem %s7, %s344
      %p346 = scmp.lt.s32.totalorder %s23, 1
      %s347 = scalar_select %p346, %s23, 1
      %p348 = scmp.lt.s32.totalorder %s24, 0
      %s349 = scalar_select %p348, %s24, 0
      %s350 = sadd.s32 %s349, %s347
      %s351 = smul.addr %s350, 4
      %s352 = scalar_lea.vmem %s0, %s351
      %p353 = scmp.lt.s32.totalorder %s23, 1
      %s354 = scalar_select %p353, %s23, 1
      %s355 = smul.addr %s354, 8
      %s356 = scalar_lea.vmem %s1, %s355
      %p357 = scmp.lt.s32.totalorder %s23, 1
      %s358 = scalar_select %p357, %s23, 1
      %s359 = smul.addr %s358, 4
      %s360 = scalar_lea.vmem %s2, %s359
      %p361 = scmp.lt.s32.totalorder %s23, 1
      %s362 = scalar_select %p361, %s23, 1
      %p363 = scmp.lt.s32.totalorder %s24, 0
      %s364 = scalar_select %p363, %s24, 0
      %s365 = sadd.s32 %s364, %s362
      %s366 = smul.addr %s365, 4
      %s367 = scalar_lea.vmem %s3, %s366
      %p368 = scmp.lt.s32.totalorder %s23, 1
      %s369 = scalar_select %p368, %s23, 1
      %p370 = scmp.lt.s32.totalorder %s24, 0
      %s371 = scalar_select %p370, %s24, 0
      %s372 = sadd.s32 %s371, %s369
      %s373 = smul.addr %s372, 4
      %s374 = scalar_lea.vmem %s6, %s373
      %p375 = scmp.lt.s32.totalorder %s23, 1
      %s376 = scalar_select %p375, %s23, 1
      %s377 = smul.addr %s376, 4
      %s378 = smul.addr %s377, 8
      %s379 = scalar_lea.vmem %s7, %s378
      %v381 = vld [vmem:[%s352] sm:$0x7]
      %v382 = vld [vmem:[%s356] sm:$0xff]
      %v383 = vld [vmem:[%s360] sm:$0xf]
      %385 = vset.pattern.permute.xlu0 0
      %386 = vperm.xlu0 %385, %v382
      %v387 = vpop.permute.xlu0 %386
      %v389 = vlaneseq
      %v390 = vshrl.u32 %v389, 7
      %v391 = vsub.s32 0, %v390
      %v392 = vrot.slane %v381, %v391
      %v393 = vsub.f32 %v387, %v392
      %v394 = vmul.f32 %v393, %v393
      %395 = vset.pattern.permute.xlu0 1
      %396 = vperm.xlu0 %395, %v382
      %v397 = vpop.permute.xlu0 %396
      %v399 = vlaneseq
      %v400 = vshrl.u32 %v399, 7
      %v401 = vsub.s32 1, %v400
      %v402 = vrot.slane %v381, %v401
      %v403 = vsub.f32 %v397, %v402
      %v404 = vmul.f32 %v403, %v403
      %v405 = vadd.f32 %v394, %v404
      %406 = vset.pattern.permute.xlu0 2
      %407 = vperm.xlu0 %406, %v382
      %v408 = vpop.permute.xlu0 %407
      %v410 = vlaneseq
      %v411 = vshrl.u32 %v410, 7
      %v412 = vsub.s32 2, %v411
      %v413 = vrot.slane %v381, %v412
      %v414 = vsub.f32 %v408, %v413
      %v415 = vmul.f32 %v414, %v414
      %v416 = vadd.f32 %v405, %v415
      %v417 = vrot.slane %v416, 4
      %v418 = vmin.f32 %v416, %v417
      %v419 = vrot.slane %v418, 2
      %v420 = vmin.f32 %v418, %v419
      %v421 = vrot.slane %v420, 1
      %v422 = vmin.f32 %v420, %v421
      %vm423 = vcmp.gt.f32.partialorder %v416, %v422
      %v424 = vsel %vm423, %v416, inf
      %v425 = vrot.slane %v424, 4
      %v426 = vmin.f32 %v424, %v425
      %v427 = vrot.slane %v426, 2
      %v428 = vmin.f32 %v426, %v427
      %v429 = vrot.slane %v428, 1
      %v430 = vmin.f32 %v428, %v429
      %vm431 = vcmp.gt.f32.partialorder %v416, %v430
      %v432 = vsel %vm431, %v416, inf
      %v433 = vrot.slane %v432, 4
      %v434 = vmin.f32 %v432, %v433
      %v435 = vrot.slane %v434, 2
      %v436 = vmin.f32 %v434, %v435
      %v437 = vrot.slane %v436, 1
      %v438 = vmin.f32 %v436, %v437
      %v439 = vadd.f32 %v422, 1e-08
      %v440 = vrcp.pop %v439
      %v441 = vadd.f32 %v430, 1e-08
      %v442 = vrcp.pop %v441
      %v443 = vadd.f32 %v438, 1e-08
      %v444 = vrcp.pop %v443
      %vm445 = vcmp.le.f32.partialorder %v416, %v422
      %v446 = vsel %vm445, %v440, 0.0
      %vm447 = vcmp.le.f32.partialorder %v416, %v430
      %vm448 = vmand %vm423, %vm447
      %v449 = vsel %vm448, %v442, 0.0
      %v450 = vadd.f32 %v446, %v449
      %vm451 = vcmp.le.f32.partialorder %v416, %v438
      %vm452 = vmand %vm431, %vm451
      %v453 = vsel %vm452, %v444, 0.0
      %v454 = vadd.f32 %v450, %v453
      %v455 = vrot.slane %v454, 4
      %v456 = vadd.f32 %v454, %v455
      %v457 = vrot.slane %v456, 2
      %v458 = vadd.f32 %v456, %v457
      %v459 = vrot.slane %v458, 1
      %v460 = vadd.f32 %v458, %v459
      %v461 = vrcp.pop %v460
      %v462 = vpack.c.bf16 %v454, %v454
      %vm463 = vcmask 64512
      %v465 = vsel %vm463, %v383, 0
      %vm467 = vcmask 1043456
      %v469 = vsel %vm467, %v462, 0
      %471 = vmatprep.subr.bf16.mxu0 0
      %472 = vmatpush1.bf16.msra.mxu0 0
      %473 = vmatprep.subr.bf16.mxu0 0
      %474 = vmatpush1.bf16.msra.mxu0 0
      %475 = vmatprep.subr.bf16.mxu0 0
      %476 = vmatpush1.bf16.msra.mxu0 0
      %477 = vmatprep.subr.bf16.mxu0 0
      %478 = vmatpush1.bf16.msra.mxu0 0
      %479 = vmatprep.subr.bf16.mxu0 0
      %480 = vmatpush1.bf16.msra.mxu0 0
      %481 = vmatprep.subr.bf16.mxu0 0
      %482 = vmatpush1.bf16.msra.mxu0 0
      %483 = vmatprep.subr.bf16.mxu0 0
      %484 = vmatpush1.bf16.msra.mxu0 0
      %485 = vmatprep.subr.bf16.mxu0 0
      %486 = vmatpush1.bf16.msra.mxu0 %v469
      %487 = vmatprep.subr.bf16.mxu0 0
      %488 = vmatpush2.bf16.msra.mxu0 0
      %489 = vmatprep.subr.bf16.mxu0 0
      %490 = vmatpush2.bf16.msra.mxu0 0
      %491 = vmatprep.subr.bf16.mxu0 0
      %492 = vmatpush2.bf16.msra.mxu0 0
      %493 = vmatprep.subr.bf16.mxu0 0
      %494 = vmatpush2.bf16.msra.mxu0 0
      %495 = vmatprep.subr.bf16.mxu0 0
      %496 = vmatpush2.bf16.msra.mxu0 0
      %497 = vmatprep.subr.bf16.mxu0 0
      %498 = vmatpush2.bf16.msra.mxu0 0
      %499 = vmatprep.subr.bf16.mxu0 0
      %500 = vmatpush2.bf16.msra.mxu0 0
      %501 = vmatprep.subr.bf16.mxu0 0
      %502 = vmatpush2.bf16.msra.mxu0 0
      %503 = vmatprep.mubr.bf16.mxu0 0
      %504 = vmatmul.mubr.bf16.gmra.mxu0 %v465
      %v505 = vpop.f32.mrf.mxu0
      %v506 = vadd.f32 0.0, %v505
      %v507 = vpop.f32.mrf.mxu0
      %v508 = vpop.f32.mrf.mxu0
      %v509 = vpop.f32.mrf.mxu0
      %510 = vdwg.mxu0
      %v511 = vmul.f32 %v506, %v461
      %v512 = vpack.c.bf16 %v511, %v511
      %513 = vst [vmem:[%s374] sm:$0xf] %v512
      %v514 = vld [vmem:[%s5] sm:$0xf]
      %v515 = vld [vmem:[%s5 + $0x4] sm:$0xf]
      %v516 = vld [vmem:[%s5 + $0x8] sm:$0xf]
      %v517 = vld [vmem:[%s5 + $0xc] sm:$0xf]
      %v518 = vld [vmem:[%s4] sm:$0xf]
      %v519 = vld [vmem:[%s4 + $0x4] sm:$0xf]
      %v520 = vld [vmem:[%s4 + $0x8] sm:$0xf]
      %v521 = vld [vmem:[%s4 + $0xc] sm:$0xf]
      %v522 = vld [vmem:[%s367] sm:$0x7]
      %v527 = vunpack.c.l.b16 %v518
      %v528 = vunpack.c.l.b16 %v519
      %v529 = vunpack.c.l.b16 %v520
      %v530 = vunpack.c.l.b16 %v521
      %v531 = vpack.c.b16 %v528, %v527
      %v532 = vpack.c.b16 %v530, %v529
      %vm533 = vcmask 48128
      %v535 = vsel %vm533, %v531, 0
      %v538 = vsel %vm533, %v532, 0
      %vm540 = vcmask 1042432
      %v542 = vsel %vm540, %v522, 0
      %544 = vmatprep.subr.bf16.mxu0 0
      %545 = vmatpush1.bf16.msra.mxu0 0
      %546 = vmatprep.subr.bf16.mxu0 0
      %547 = vmatpush1.bf16.msra.mxu0 0
      %548 = vmatprep.subr.bf16.mxu0 0
      %549 = vmatpush1.bf16.msra.mxu0 0
      %550 = vmatprep.subr.bf16.mxu0 0
      %551 = vmatpush1.bf16.msra.mxu0 0
      %552 = vmatprep.subr.bf16.mxu0 0
      %553 = vmatpush1.bf16.msra.mxu0 0
      %554 = vmatprep.subr.bf16.mxu0 0
      %555 = vmatpush1.bf16.msra.mxu0 0
      %556 = vmatprep.subr.bf16.mxu0 0
      %557 = vmatpush1.bf16.msra.mxu0 0
      %558 = vmatprep.subr.bf16.mxu0 0
      %559 = vmatpush1.bf16.msra.mxu0 %v542
      %560 = vmatprep.subr.bf16.mxu0 0
      %561 = vmatpush2.bf16.msra.mxu0 0
      %562 = vmatprep.subr.bf16.mxu0 0
      %563 = vmatpush2.bf16.msra.mxu0 0
      %564 = vmatprep.subr.bf16.mxu0 0
      %565 = vmatpush2.bf16.msra.mxu0 0
      %566 = vmatprep.subr.bf16.mxu0 0
      %567 = vmatpush2.bf16.msra.mxu0 0
      %568 = vmatprep.subr.bf16.mxu0 0
      %569 = vmatpush2.bf16.msra.mxu0 0
      %570 = vmatprep.subr.bf16.mxu0 0
      %571 = vmatpush2.bf16.msra.mxu0 0
      %572 = vmatprep.subr.bf16.mxu0 0
      %573 = vmatpush2.bf16.msra.mxu0 0
      %574 = vmatprep.subr.bf16.mxu0 0
      %575 = vmatpush2.bf16.msra.mxu0 0
      %576 = vmatprep.mubr.bf16.mxu0 0
      %577 = vmatmul.mubr.bf16.gmra.mxu0 %v535
      %v578 = vpop.f32.mrf.mxu0
      %v579 = vadd.f32 0.0, %v578
      %v580 = vpop.f32.mrf.mxu0
      %v581 = vpop.f32.mrf.mxu0
      %v582 = vadd.f32 0.0, %v581
      %v583 = vpop.f32.mrf.mxu0
      %584 = vmatprep.mubr.bf16.mxu0 0
      %585 = vmatmul.mubr.bf16.gmra.mxu0 %v538
      %v586 = vpop.f32.mrf.mxu0
      %v587 = vadd.f32 0.0, %v586
      %v588 = vpop.f32.mrf.mxu0
      %v589 = vpop.f32.mrf.mxu0
      %v590 = vadd.f32 0.0, %v589
      %v591 = vpop.f32.mrf.mxu0
      %592 = vdwg.mxu0
      %v597 = vunpack.c.l.b16 %v514
      %v598 = vunpack.c.l.b16 %v515
      %v599 = vunpack.c.l.b16 %v516
      %v600 = vunpack.c.l.b16 %v517
      %v601 = vpack.c.b16 %v598, %v597
      %v602 = vpack.c.b16 %v600, %v599
      %v604 = vsel %vm463, %v601, 0
      %v607 = vsel %vm463, %v602, 0
      %v610 = vsel %vm467, %v512, 0
      %612 = vmatprep.subr.bf16.mxu0 0
      %613 = vmatpush1.bf16.msra.mxu0 0
      %614 = vmatprep.subr.bf16.mxu0 0
      %615 = vmatpush1.bf16.msra.mxu0 0
      %616 = vmatprep.subr.bf16.mxu0 0
      %617 = vmatpush1.bf16.msra.mxu0 0
      %618 = vmatprep.subr.bf16.mxu0 0
      %619 = vmatpush1.bf16.msra.mxu0 0
      %620 = vmatprep.subr.bf16.mxu0 0
      %621 = vmatpush1.bf16.msra.mxu0 0
      %622 = vmatprep.subr.bf16.mxu0 0
      %623 = vmatpush1.bf16.msra.mxu0 0
      %624 = vmatprep.subr.bf16.mxu0 0
      %625 = vmatpush1.bf16.msra.mxu0 0
      %626 = vmatprep.subr.bf16.mxu0 0
      %627 = vmatpush1.bf16.msra.mxu0 %v610
      %628 = vmatprep.subr.bf16.mxu0 0
      %629 = vmatpush2.bf16.msra.mxu0 0
      %630 = vmatprep.subr.bf16.mxu0 0
      %631 = vmatpush2.bf16.msra.mxu0 0
      %632 = vmatprep.subr.bf16.mxu0 0
      %633 = vmatpush2.bf16.msra.mxu0 0
      %634 = vmatprep.subr.bf16.mxu0 0
      %635 = vmatpush2.bf16.msra.mxu0 0
      %636 = vmatprep.subr.bf16.mxu0 0
      %637 = vmatpush2.bf16.msra.mxu0 0
      %638 = vmatprep.subr.bf16.mxu0 0
      %639 = vmatpush2.bf16.msra.mxu0 0
      %640 = vmatprep.subr.bf16.mxu0 0
      %641 = vmatpush2.bf16.msra.mxu0 0
      %642 = vmatprep.subr.bf16.mxu0 0
      %643 = vmatpush2.bf16.msra.mxu0 0
      %644 = vmatprep.mubr.bf16.mxu0 0
      %645 = vmatmul.mubr.bf16.gmra.mxu0 %v604
      %v646 = vpop.f32.mrf.mxu0
      %v647 = vadd.f32 %v579, %v646
      %v648 = vpop.f32.mrf.mxu0
      %v649 = vpop.f32.mrf.mxu0
      %v650 = vadd.f32 %v582, %v649
      %v651 = vpop.f32.mrf.mxu0
      %652 = vmatprep.mubr.bf16.mxu0 0
      %653 = vmatmul.mubr.bf16.gmra.mxu0 %v607
      %v654 = vpop.f32.mrf.mxu0
      %v655 = vadd.f32 %v587, %v654
      %v656 = vpop.f32.mrf.mxu0
      %v657 = vpop.f32.mrf.mxu0
      %v658 = vadd.f32 %v590, %v657
      %v659 = vpop.f32.mrf.mxu0
      %660 = vdwg.mxu0
      %s661 = smul.u32 %s24, 128
      %v662 = vlaneseq
      %v663 = vand.u32 %v662, 127
      %v664 = vstv %s661
      %v665 = vadd.s32 %v664, %v663
      %vm666 = vcmp.lt.s32.totalorder %v665, 16
      %v667 = vsel %vm666, 1, 0
      %v668 = vcvt.s32.f32 %v667
      %v669 = vmul.f32 %v647, %v668
      %v670 = vmul.f32 %v650, %v668
      %v671 = vmul.f32 %v655, %v668
      %v672 = vmul.f32 %v658, %v668
      %673 = vadd.xlane.f32.xlu0 %v669
      %v674 = vpop.xlane.xlu0 %673
      %675 = vadd.xlane.f32.xlu0 %v670
      %v676 = vpop.xlane.xlu0 %675
      %677 = vadd.xlane.f32.xlu0 %v671
      %v678 = vpop.xlane.xlu0 %677
      %679 = vadd.xlane.f32.xlu0 %v672
      %v680 = vpop.xlane.xlu0 %679
      %v681 = vmul.f32 %v669, %v669
      %v682 = vmul.f32 %v670, %v670
      %v683 = vmul.f32 %v671, %v671
      %v684 = vmul.f32 %v672, %v672
      %685 = vadd.xlane.f32.xlu0 %v681
      %v686 = vpop.xlane.xlu0 %685
      %687 = vadd.xlane.f32.xlu0 %v682
      %v688 = vpop.xlane.xlu0 %687
      %689 = vadd.xlane.f32.xlu0 %v683
      %v690 = vpop.xlane.xlu0 %689
      %691 = vadd.xlane.f32.xlu0 %v684
      %v692 = vpop.xlane.xlu0 %691
      %vm693 = vcmask 7168
      %v694 = vsel %vm693, %v674, %v686
      %v695 = vsel %vm693, %v676, %v688
      %v696 = vsel %vm693, %v678, %v690
      %v697 = vsel %vm693, %v680, %v692
      %p698 = scmp.eq.s32.totalorder %s24, 0
      // Predicated region
      $region45: #{feature_propagation_forward.3} parent=43 // pred_check
        %p699 = pneg %p698
      $region46: #{feature_propagation_forward.3} parent=43 // pred_check_branch
        %701 = sbr.rel (%p699) target = $region48
      $region47: #{feature_propagation_forward.3} parent=43 // pred_region
        %vm702 = vcmask 15360
        %703 = vst.msk [vmem:[%s379] sm:$0xff] %vm702, 0.0
        %704 = vst.msk [vmem:[%s379 + $0x8] sm:$0xff] %vm702, 0.0
        %705 = vst.msk [vmem:[%s379 + $0x10] sm:$0xff] %vm702, 0.0
        %706 = vst.msk [vmem:[%s379 + $0x18] sm:$0xff] %vm702, 0.0
      $region48: #{feature_propagation_forward.3} parent=43 // pred_fallthru
        _
      %v707 = vld [vmem:[%s379] sm:$0xff]
      %v708 = vld [vmem:[%s379 + $0x8] sm:$0xff]
      %v709 = vld [vmem:[%s379 + $0x10] sm:$0xff]
      %v710 = vld [vmem:[%s379 + $0x18] sm:$0xff]
      %v711 = vadd.f32 %v707, %v694
      %v712 = vadd.f32 %v708, %v695
      %v713 = vadd.f32 %v709, %v696
      %v714 = vadd.f32 %v710, %v697
      %vm715 = vcmask 15360
      %716 = vst.msk [vmem:[%s379] sm:$0xff] %vm715, %v711
      %717 = vst.msk [vmem:[%s379 + $0x8] sm:$0xff] %vm715, %v712
      %718 = vst.msk [vmem:[%s379 + $0x10] sm:$0xff] %vm715, %v713
      %719 = vst.msk [vmem:[%s379 + $0x18] sm:$0xff] %vm715, %v714
      %p720 = scmp.lt.s32.totalorder %s23, 1
      %s721 = scalar_select %p720, %s23, 1
      %p722 = scmp.lt.s32.totalorder %s24, 0
      %s723 = scalar_select %p722, %s24, 0
      %s724 = sadd.s32 %s723, %s721
      %s725 = smul.addr %s724, 4
      %s726 = scalar_lea.vmem %s6, %s725
      %p727 = scmp.lt.s32.totalorder %s23, 1
      %s728 = scalar_select %p727, %s23, 1
      %s729 = smul.addr %s728, 4
      %s730 = smul.addr %s729, 8
      %s731 = scalar_lea.vmem %s7, %s730
      // Predicated region
      $region49: #{feature_propagation_forward.3} parent=43 // pred_check
        %p732 = pneg %p201
      $region50: #{feature_propagation_forward.3} parent=43 // pred_check_branch
        %734 = sbr.rel (%p732) target = $region52
      $region51: #{feature_propagation_forward.3} parent=43 // pred_region
        _
      $region52: #{feature_propagation_forward.3} parent=43 // pred_fallthru
        _
      // Predicated region
      $region53: #{feature_propagation_forward.3} parent=43 // pred_check
        %p735 = pneg %p227
      $region54: #{feature_propagation_forward.3} parent=43 // pred_check_branch
        %737 = sbr.rel (%p735) target = $region56
      $region55: #{feature_propagation_forward.3} parent=43 // pred_region
        _
      $region56: #{feature_propagation_forward.3} parent=43 // pred_fallthru
        _
    $region44: #{feature_propagation_forward.3} parent=5 // pred_fallthru
      _
    %p738 = scmp.le.s32.totalorder 2, %s14
    // Predicated region
    $region57: #{feature_propagation_forward.3} parent=5 // pred_check
      %p739 = pneg %p738
    $region58: #{feature_propagation_forward.3} parent=5 // pred_check_branch
      %741 = sbr.rel (%p739) target = $region60
    $region59: #{feature_propagation_forward.3} parent=5 // pred_region
      %s742 = ssub.s32 %s14, 2
      // Predicated region
      $region61: #{feature_propagation_forward.3} parent=59 // pred_check
        %p743 = pneg %p207
      $region62: #{feature_propagation_forward.3} parent=59 // pred_check_branch
        %745 = sbr.rel (%p743) target = $region64
      $region63: #{feature_propagation_forward.3} parent=59 // pred_region
        %p746 = scmp.lt.s32.totalorder %s25, 1
        %s747 = scalar_select %p746, %s25, 1
        %p748 = scmp.lt.s32.totalorder %s26, 0
        %s749 = scalar_select %p748, %s26, 0
        %s750 = sadd.s32 %s749, %s747
        %s751 = smul.addr %s750, 4
        %s752 = scalar_lea.vmem %s6, %s751
      $region64: #{feature_propagation_forward.3} parent=59 // pred_fallthru
        _
      // Predicated region
      $region65: #{feature_propagation_forward.3} parent=59 // pred_check
        %p753 = pneg %p233
      $region66: #{feature_propagation_forward.3} parent=59 // pred_check_branch
        %755 = sbr.rel (%p753) target = $region68
      $region67: #{feature_propagation_forward.3} parent=59 // pred_region
        %p756 = scmp.lt.s32.totalorder %s25, 1
        %s757 = scalar_select %p756, %s25, 1
        %s758 = smul.addr %s757, 4
        %s759 = smul.addr %s758, 8
        %s760 = scalar_lea.vmem %s7, %s759
      $region68: #{feature_propagation_forward.3} parent=59 // pred_fallthru
        _
    $region60: #{feature_propagation_forward.3} parent=5 // pred_fallthru
      _
  $region6: #{feature_propagation_forward.3} parent=0 // loop_footer
    %s18 = sadd.s32 1, %s14
  $region7: #{feature_propagation_forward.3} parent=0 // loop_footer_branch
    %13 = sbr.rel target = $region3
  $region8: #{feature_propagation_forward.3} parent=0 // loop_exit
    _

</llo_original>
